<compile_context>
chip_gen: v7x
topology: tpu7x:2x2x1
jax: 0.10.0
libtpu: 0.0.40
codegen_flags: <defaults>
</compile_context>

<pallas_src>
import jax
import jax.numpy as jnp
import numpy as np
from jax.experimental import pallas as pl
from jax.experimental.pallas import tpu as pltpu

K = 2            # k (number of GCN branches)
N = 16           # nodes per graph-batch
CIN = 4          # input_channels
DIM = 32         # hidden_units
G = 2            # graphs per graph-batch
B = 8            # independent graph-batches per pallas_call (grid axis)
KD = K * DIM     # 64

# ---------------- packed-parameter buffer layout (P_ROWS, 128) f32 ----------------
P_LANES = 128
BIAS_OFF = 0                    # rows 0..7 : all 1-row params (one tile read)
#   row 0: lanes[0:KD]   = b1[0]|b1[1]        lanes[KD:2KD] = b2[0]|b2[1]
#   row 1: lanes[0:32]=m1b1  [32:64]=m1b2  [64:96]=m2b1  [96:128]=m2b2
#   row 2: lanes[0:32]=lin_w              [32]=lin_b
WC1_OFF = 8                     # rows 8..11  : (CIN, KD)  conv1 weights stacked along lanes
WC2_OFF = 16                    # rows 16..47 : lanes[0:KD]=conv2 W (DIM,KD),
#                                               lanes[64:96]=mlp1_W2, lanes[96:128]=mlp2_W2
MW1_OFF = 48                    # rows 48..111: lanes[0:32]=mlp1_W1 (KD,DIM), lanes[32:64]=mlp2_W1
P_ROWS = MW1_OFF + KD           # 112  (multiple of 8)


def gcn_tuple_kernel(x_ref, adj_ref, pool_ref, p_ref, out_ref):
    f32 = jnp.float32

    # ---- one-time parameter reads (tile loads + in-register slicing) ----
    bias_tile = p_ref[BIAS_OFF:BIAS_OFF + 8, :]                    # (8, 128)
    b1_cat = bias_tile[0:1, 0:KD]                                  # (1, KD)
    b2_cat = bias_tile[0:1, KD:2 * KD]                             # (1, KD)
    m1b1 = bias_tile[1:2, 0:DIM]
    m1b2 = bias_tile[1:2, DIM:2 * DIM]
    m2b1 = bias_tile[1:2, 2 * DIM:3 * DIM]
    m2b2 = bias_tile[1:2, 3 * DIM:4 * DIM]
    linw = bias_tile[2:3, 0:DIM]                                   # (1, DIM)
    linb = bias_tile[2:3, DIM:DIM + 1]                             # (1, 1)

    wc1 = p_ref[WC1_OFF:WC1_OFF + CIN, 0:KD]                       # (CIN, KD)
    blk32 = p_ref[WC2_OFF:WC2_OFF + DIM, :]                        # (DIM, 128)
    wc2 = blk32[:, 0:KD]                                           # (DIM, KD)
    m1w2 = blk32[:, KD:KD + DIM]                                   # (DIM, DIM)
    m2w2 = blk32[:, KD + DIM:KD + 2 * DIM]                         # (DIM, DIM)
    blk64 = p_ref[MW1_OFF:MW1_OFF + KD, 0:2 * DIM]                 # (KD, 2*DIM)
    m1w1 = blk64[:, 0:DIM]                                         # (KD, DIM)
    m2w1 = blk64[:, DIM:2 * DIM]                                   # (KD, DIM)

    # ---- this grid step's graph-batch ----
    x = x_ref[0]                                                   # (N, CIN)
    pool = pool_ref[0]                                             # (G, N)

    def gcn_mlp_block(xin, wc, b_cat, mw1, mb1, mw2, mb2):
        # one fused MXU issue for all K branch projections: X @ [W_0 | ... | W_{K-1}]
        h_all = jnp.dot(xin, wc, preferred_element_type=f32)       # (N, KD)
        feats = jnp.concatenate(
            [jnp.dot(adj_ref[0, i], h_all[:, i * DIM:(i + 1) * DIM],
                     preferred_element_type=f32)
             for i in range(K)], axis=-1)                          # (N, KD)
        feats = jnp.maximum(feats + b_cat, 0.0)                    # bias + ReLU (all branches)
        # single (N,KD)@(KD,DIM) contraction == reference concat-then-matmul
        h = jnp.maximum(jnp.dot(feats, mw1, preferred_element_type=f32) + mb1, 0.0)
        return jnp.dot(h, mw2, preferred_element_type=f32) + mb2   # (N, DIM)

    # block 1: k x GCNConv(CIN -> DIM) + ReLU, then mlp_1
    x2 = gcn_mlp_block(x, wc1, b1_cat, m1w1, m1b1, m1w2, m1b2)
    # block 2: k x GCNConv(DIM -> DIM) + ReLU, then mlp_2
    x3 = gcn_mlp_block(x2, wc2, b2_cat, m2w1, m2b1, m2w2, m2b2)

    # global_add_pool (dense one-hot matmul) + final Linear(DIM, 1)
    pooled = jnp.dot(pool, x3, preferred_element_type=f32)         # (G, DIM)
    # head as VPU multiply + lane reduce (no 1-lane-wide MXU matmul)
    out_ref[0] = jnp.sum(pooled * linw, axis=-1, keepdims=True) + linb   # (G, 1)


def gcn_tuple_net(x, adj, pool, pbuf):
    nb = x.shape[0]
    # rough per-batch FLOP / byte counts for the scheduler hint
    flops_per_b = (2 * N * CIN * KD + 2 * K * N * N * DIM + 2 * N * KD * DIM + 2 * N * DIM * DIM
                   + 2 * N * DIM * KD + 2 * K * N * N * DIM + 2 * N * KD * DIM + 2 * N * DIM * DIM
                   + 2 * G * N * DIM + 2 * G * DIM)
    bytes_accessed = 4 * (x.size + adj.size + pool.size + pbuf.size + nb * G)
    out = pl.pallas_call(
        gcn_tuple_kernel,
        out_shape=jax.ShapeDtypeStruct((nb, G, 1), jnp.float32),
        grid=(nb,),
        in_specs=[
            pl.BlockSpec((1, N, CIN), lambda b: (b, 0, 0)),
            pl.BlockSpec((1, K, N, N), lambda b: (b, 0, 0, 0)),
            pl.BlockSpec((1, G, N), lambda b: (b, 0, 0)),
            pl.BlockSpec((P_ROWS, P_LANES), lambda b: (0, 0)),     # resident across grid
        ],
        out_specs=pl.BlockSpec((1, G, 1), lambda b: (b, 0, 0)),
        compiler_params=pltpu.CompilerParams(
            dimension_semantics=("parallel",)),                    # v7x: shard batch over 2 TCs
        cost_estimate=pl.CostEstimate(flops=int(nb * flops_per_b),
                                      transcendentals=0,
                                      bytes_accessed=int(bytes_accessed)),
    )(x, adj, pool, pbuf)
    return out[:, :, 0]                                            # squeeze(-1) -> (B, G)


# ------------------------- plain-JAX / numpy glue -------------------------

def gcn_norm_dense(edge_index, n):
    """torch_geometric GCNConv default normalization: D^-1/2 (A + I) D^-1/2."""
    src, dst = edge_index
    a = np.zeros((n, n), np.float32)
    a[dst, src] = 1.0
    a = a + np.eye(n, dtype=np.float32)          # add self-loops
    deg = a.sum(axis=1)
    dinv = 1.0 / np.sqrt(np.maximum(deg, 1e-12))
    return (dinv[:, None] * a) * dinv[None, :]


def make_edge_sets(hops):
    """K edge sets: undirected rings (given hop distances) within each graph."""
    edge_sets = []
    for hop in hops:
        src, dst = [], []
        for g in range(G):
            base = g * (N // G)
            m = N // G
            for v in range(m):
                u = (v + hop) % m
                src += [base + v, base + u]
                dst += [base + u, base + v]
        edge_sets.append(np.array([src, dst], dtype=np.int32))
    return edge_sets


def init_params(key):
    ks = jax.random.split(key, 16)
    s = 0.1
    return {
        "w1":   s * jax.random.normal(ks[0], (K, CIN, DIM), jnp.float32),
        "b1":   s * jax.random.normal(ks[1], (K, DIM), jnp.float32),
        "w2":   s * jax.random.normal(ks[2], (K, DIM, DIM), jnp.float32),
        "b2":   s * jax.random.normal(ks[3], (K, DIM), jnp.float32),
        "m1w1": s * jax.random.normal(ks[4], (KD, DIM), jnp.float32),
        "m1b1": s * jax.random.normal(ks[5], (1, DIM), jnp.float32),
        "m1w2": s * jax.random.normal(ks[6], (DIM, DIM), jnp.float32),
        "m1b2": s * jax.random.normal(ks[7], (1, DIM), jnp.float32),
        "m2w1": s * jax.random.normal(ks[8], (KD, DIM), jnp.float32),
        "m2b1": s * jax.random.normal(ks[9], (1, DIM), jnp.float32),
        "m2w2": s * jax.random.normal(ks[10], (DIM, DIM), jnp.float32),
        "m2b2": s * jax.random.normal(ks[11], (1, DIM), jnp.float32),
        "linw": s * jax.random.normal(ks[12], (DIM, 1), jnp.float32),
        "linb": s * jax.random.normal(ks[13], (1, 1), jnp.float32),
    }


def pack_params(p):
    """Pack all parameters into one lane-dense (P_ROWS, 128) f32 buffer (single DMA)."""
    buf = np.zeros((P_ROWS, P_LANES), np.float32)
    # bias tile (rows 0..7)
    buf[0, 0:KD] = np.asarray(p["b1"]).reshape(-1)
    buf[0, KD:2 * KD] = np.asarray(p["b2"]).reshape(-1)
    buf[1, 0:DIM] = np.asarray(p["m1b1"]).reshape(-1)
    buf[1, DIM:2 * DIM] = np.asarray(p["m1b2"]).reshape(-1)
    buf[1, 2 * DIM:3 * DIM] = np.asarray(p["m2b1"]).reshape(-1)
    buf[1, 3 * DIM:4 * DIM] = np.asarray(p["m2b2"]).reshape(-1)
    buf[2, 0:DIM] = np.asarray(p["linw"]).reshape(-1)
    buf[2, DIM] = float(np.asarray(p["linb"]).reshape(-1)[0])
    # conv weights (branch i stacked along lanes)
    for i in range(K):
        buf[WC1_OFF:WC1_OFF + CIN, i * DIM:(i + 1) * DIM] = np.asarray(p["w1"][i])
        buf[WC2_OFF:WC2_OFF + DIM, i * DIM:(i + 1) * DIM] = np.asarray(p["w2"][i])
    # 32-row matrices share the conv2 row block across lanes
    buf[WC2_OFF:WC2_OFF + DIM, KD:KD + DIM] = np.asarray(p["m1w2"])
    buf[WC2_OFF:WC2_OFF + DIM, KD + DIM:KD + 2 * DIM] = np.asarray(p["m2w2"])
    # the two (KD, DIM) first-MLP weights share one row block
    buf[MW1_OFF:MW1_OFF + KD, 0:DIM] = np.asarray(p["m1w1"])
    buf[MW1_OFF:MW1_OFF + KD, DIM:2 * DIM] = np.asarray(p["m2w1"])
    return jnp.asarray(buf)


def reference_forward_one(x_b, adj_b, pool_b, p):
    """Pure-JAX reference of the original (unpacked, concat-based) math for one batch."""
    feats = [jnp.maximum(adj_b[i] @ (x_b @ p["w1"][i]) + p["b1"][i], 0.0) for i in range(K)]
    cat = jnp.concatenate(feats, axis=-1)
    x2 = jnp.maximum(cat @ p["m1w1"] + p["m1b1"], 0.0) @ p["m1w2"] + p["m1b2"]
    feats = [jnp.maximum(adj_b[i] @ (x2 @ p["w2"][i]) + p["b2"][i], 0.0) for i in range(K)]
    cat = jnp.concatenate(feats, axis=-1)
    x3 = jnp.maximum(cat @ p["m2w1"] + p["m2b1"], 0.0) @ p["m2w2"] + p["m2b2"]
    pooled = pool_b @ x3
    return (pooled @ p["linw"] + p["linb"])[:, 0]                  # (G,)


if __name__ == "__main__":
    key = jax.random.PRNGKey(0)
    kx, kp = jax.random.split(key)

    # node features for B independent graph-batches (data.x) and batch assignment (data.batch)
    x = jax.random.normal(kx, (B, N, CIN), jnp.float32)
    batch = np.repeat(np.arange(G), N // G)      # first half graph 0, second half graph 1

    # per-batch edge_index_0 / edge_index_1 -> dense normalized adjacencies (B, K, N, N)
    # (hops vary per batch so the batch-grid indexing of adj is actually exercised)
    adj_np = np.stack([
        np.stack([gcn_norm_dense(e, N) for e in make_edge_sets((1 + b % 4, 2 + b % 4))])
        for b in range(B)])
    adj = jnp.asarray(adj_np, jnp.float32)

    # global_add_pool as a dense (G, N) one-hot matrix, same for every batch
    pool_np = (batch[None, :] == np.arange(G)[:, None]).astype(np.float32)
    pool = jnp.asarray(np.broadcast_to(pool_np, (B, G, N)).copy())

    params = init_params(kp)
    pbuf = pack_params(params)

    out = gcn_tuple_net(x, adj, pool, pbuf)
    out = jax.block_until_ready(out)

    ref = jnp.stack([reference_forward_one(x[b], adj[b], pool[b], params) for b in range(B)])
    assert out.shape == (B, G)
    np.testing.assert_allclose(np.asarray(out), np.asarray(ref), rtol=1e-5, atol=1e-5)

    print("KERNEL_OK")
</pallas_src>

<mosaic_0001>
module attributes {stable_mosaic.version = 11 : i64} {
  func.func @gcn_tuple_kernel(%arg0: i32, %arg1: memref<1x16x4xf32, #tpu.memory_space<vmem>>, %arg2: memref<1x2x16x16xf32, #tpu.memory_space<vmem>>, %arg3: memref<1x2x16xf32, #tpu.memory_space<vmem>>, %arg4: memref<112x128xf32, #tpu.memory_space<vmem>>, %arg5: memref<1x2x1xf32, #tpu.memory_space<vmem>>) attributes {dimension_semantics = [#tpu.dimension_semantics<parallel>], iteration_bounds = array<i64: 8>, scalar_prefetch = 0 : i64, scratch_operands = 0 : i64, tpu.core_type = #tpu.core_type<tc>, window_params = [{transform_indices = @transform_0, window_bounds = array<i64: 1, 16, 4>}, {transform_indices = @transform_1, window_bounds = array<i64: 1, 2, 16, 16>}, {transform_indices = @transform_2, window_bounds = array<i64: 1, 2, 16>}, {pipeline_mode = #tpu.pipeline_mode<synchronous>, transform_indices = @transform_3, window_bounds = array<i64: 112, 128>}, {transform_indices = @transform_4, window_bounds = array<i64: 1, 2, 1>}]} {
    %c0 = arith.constant 0 : index
    %c0_0 = arith.constant 0 : index
    %0 = vector.load %arg4[%c0, %c0_0] : memref<112x128xf32, #tpu.memory_space<vmem>>, vector<8x128xf32>
    %1 = vector.extract_strided_slice %0 {offsets = [0, 0], sizes = [1, 64], strides = [1, 1]} : vector<8x128xf32> to vector<1x64xf32>
    %2 = vector.extract_strided_slice %0 {offsets = [0, 64], sizes = [1, 64], strides = [1, 1]} : vector<8x128xf32> to vector<1x64xf32>
    %3 = vector.extract_strided_slice %0 {offsets = [1, 0], sizes = [1, 32], strides = [1, 1]} : vector<8x128xf32> to vector<1x32xf32>
    %4 = vector.extract_strided_slice %0 {offsets = [1, 32], sizes = [1, 32], strides = [1, 1]} : vector<8x128xf32> to vector<1x32xf32>
    %5 = vector.extract_strided_slice %0 {offsets = [1, 64], sizes = [1, 32], strides = [1, 1]} : vector<8x128xf32> to vector<1x32xf32>
    %6 = vector.extract_strided_slice %0 {offsets = [1, 96], sizes = [1, 32], strides = [1, 1]} : vector<8x128xf32> to vector<1x32xf32>
    %7 = vector.extract_strided_slice %0 {offsets = [2, 0], sizes = [1, 32], strides = [1, 1]} : vector<8x128xf32> to vector<1x32xf32>
    %8 = vector.extract_strided_slice %0 {offsets = [2, 32], sizes = [1, 1], strides = [1, 1]} : vector<8x128xf32> to vector<1x1xf32>
    %c8 = arith.constant 8 : index
    %c0_1 = arith.constant 0 : index
    %9 = vector.load %arg4[%c8, %c0_1] : memref<112x128xf32, #tpu.memory_space<vmem>>, vector<4x64xf32>
    %c16 = arith.constant 16 : index
    %c0_2 = arith.constant 0 : index
    %10 = vector.load %arg4[%c16, %c0_2] : memref<112x128xf32, #tpu.memory_space<vmem>>, vector<32x128xf32>
    %11 = vector.extract_strided_slice %10 {offsets = [0, 0], sizes = [32, 64], strides = [1, 1]} : vector<32x128xf32> to vector<32x64xf32>
    %12 = vector.extract_strided_slice %10 {offsets = [0, 64], sizes = [32, 32], strides = [1, 1]} : vector<32x128xf32> to vector<32x32xf32>
    %13 = vector.extract_strided_slice %10 {offsets = [0, 96], sizes = [32, 32], strides = [1, 1]} : vector<32x128xf32> to vector<32x32xf32>
    %c48 = arith.constant 48 : index
    %c0_3 = arith.constant 0 : index
    %14 = vector.load %arg4[%c48, %c0_3] : memref<112x128xf32, #tpu.memory_space<vmem>>, vector<64x64xf32>
    %15 = vector.extract_strided_slice %14 {offsets = [0, 0], sizes = [64, 32], strides = [1, 1]} : vector<64x64xf32> to vector<64x32xf32>
    %16 = vector.extract_strided_slice %14 {offsets = [0, 32], sizes = [64, 32], strides = [1, 1]} : vector<64x64xf32> to vector<64x32xf32>
    %c0_4 = arith.constant 0 : index
    %c0_5 = arith.constant 0 : index
    %c0_6 = arith.constant 0 : index
    %17 = vector.load %arg1[%c0_4, %c0_5, %c0_6] : memref<1x16x4xf32, #tpu.memory_space<vmem>>, vector<1x16x4xf32>
    %18 = vector.shape_cast %17 : vector<1x16x4xf32> to vector<16x4xf32>
    %c0_7 = arith.constant 0 : index
    %c0_8 = arith.constant 0 : index
    %c0_9 = arith.constant 0 : index
    %19 = vector.load %arg3[%c0_7, %c0_8, %c0_9] : memref<1x2x16xf32, #tpu.memory_space<vmem>>, vector<1x2x16xf32>
    %20 = vector.shape_cast %19 : vector<1x2x16xf32> to vector<2x16xf32>
    %cst = arith.constant dense<0.000000e+00> : vector<16x64xf32>
    %21 = tpu.matmul %18, %9, %cst {dimension_numbers = #tpu.dot_dimension_numbers<[1], [0], [0], [1], [0, 0, 1, 1], [], []>} : vector<16x4xf32>, vector<4x64xf32>, vector<16x64xf32> -> vector<16x64xf32>
    %c0_10 = arith.constant 0 : index
    %c0_11 = arith.constant 0 : index
    %c0_12 = arith.constant 0 : index
    %c0_13 = arith.constant 0 : index
    %22 = vector.load %arg2[%c0_10, %c0_11, %c0_12, %c0_13] : memref<1x2x16x16xf32, #tpu.memory_space<vmem>>, vector<1x1x16x16xf32>
    %23 = vector.shape_cast %22 : vector<1x1x16x16xf32> to vector<16x16xf32>
    %24 = vector.extract_strided_slice %21 {offsets = [0, 0], sizes = [16, 32], strides = [1, 1]} : vector<16x64xf32> to vector<16x32xf32>
    %cst_14 = arith.constant dense<0.000000e+00> : vector<16x32xf32>
    %25 = tpu.matmul %23, %24, %cst_14 {dimension_numbers = #tpu.dot_dimension_numbers<[1], [0], [0], [1], [0, 0, 1, 1], [], []>} : vector<16x16xf32>, vector<16x32xf32>, vector<16x32xf32> -> vector<16x32xf32>
    %c0_15 = arith.constant 0 : index
    %c1 = arith.constant 1 : index
    %c0_16 = arith.constant 0 : index
    %c0_17 = arith.constant 0 : index
    %26 = vector.load %arg2[%c0_15, %c1, %c0_16, %c0_17] : memref<1x2x16x16xf32, #tpu.memory_space<vmem>>, vector<1x1x16x16xf32>
    %27 = vector.shape_cast %26 : vector<1x1x16x16xf32> to vector<16x16xf32>
    %28 = vector.extract_strided_slice %21 {offsets = [0, 32], sizes = [16, 32], strides = [1, 1]} : vector<16x64xf32> to vector<16x32xf32>
    %cst_18 = arith.constant dense<0.000000e+00> : vector<16x32xf32>
    %29 = tpu.matmul %27, %28, %cst_18 {dimension_numbers = #tpu.dot_dimension_numbers<[1], [0], [0], [1], [0, 0, 1, 1], [], []>} : vector<16x16xf32>, vector<16x32xf32>, vector<16x32xf32> -> vector<16x32xf32>
    %30 = tpu.concatenate %25, %29 in 1 : vector<16x32xf32>, vector<16x32xf32> -> vector<16x64xf32>
    %31 = vector.broadcast %1 : vector<1x64xf32> to vector<16x64xf32>
    %32 = arith.addf %30, %31 : vector<16x64xf32>
    %cst_19 = arith.constant 0.000000e+00 : f32
    %33 = vector.broadcast %cst_19 : f32 to vector<16x64xf32>
    %34 = arith.maximumf %32, %33 : vector<16x64xf32>
    %cst_20 = arith.constant dense<0.000000e+00> : vector<16x32xf32>
    %35 = tpu.matmul %34, %15, %cst_20 {dimension_numbers = #tpu.dot_dimension_numbers<[1], [0], [0], [1], [0, 0, 1, 1], [], []>} : vector<16x64xf32>, vector<64x32xf32>, vector<16x32xf32> -> vector<16x32xf32>
    %36 = vector.broadcast %3 : vector<1x32xf32> to vector<16x32xf32>
    %37 = arith.addf %35, %36 : vector<16x32xf32>
    %cst_21 = arith.constant 0.000000e+00 : f32
    %38 = vector.broadcast %cst_21 : f32 to vector<16x32xf32>
    %39 = arith.maximumf %37, %38 : vector<16x32xf32>
    %cst_22 = arith.constant dense<0.000000e+00> : vector<16x32xf32>
    %40 = tpu.matmul %39, %12, %cst_22 {dimension_numbers = #tpu.dot_dimension_numbers<[1], [0], [0], [1], [0, 0, 1, 1], [], []>} : vector<16x32xf32>, vector<32x32xf32>, vector<16x32xf32> -> vector<16x32xf32>
    %41 = vector.broadcast %4 : vector<1x32xf32> to vector<16x32xf32>
    %42 = arith.addf %40, %41 : vector<16x32xf32>
    %cst_23 = arith.constant dense<0.000000e+00> : vector<16x64xf32>
    %43 = tpu.matmul %42, %11, %cst_23 {dimension_numbers = #tpu.dot_dimension_numbers<[1], [0], [0], [1], [0, 0, 1, 1], [], []>} : vector<16x32xf32>, vector<32x64xf32>, vector<16x64xf32> -> vector<16x64xf32>
    %c0_24 = arith.constant 0 : index
    %c0_25 = arith.constant 0 : index
    %c0_26 = arith.constant 0 : index
    %c0_27 = arith.constant 0 : index
    %44 = vector.load %arg2[%c0_24, %c0_25, %c0_26, %c0_27] : memref<1x2x16x16xf32, #tpu.memory_space<vmem>>, vector<1x1x16x16xf32>
    %45 = vector.shape_cast %44 : vector<1x1x16x16xf32> to vector<16x16xf32>
    %46 = vector.extract_strided_slice %43 {offsets = [0, 0], sizes = [16, 32], strides = [1, 1]} : vector<16x64xf32> to vector<16x32xf32>
    %cst_28 = arith.constant dense<0.000000e+00> : vector<16x32xf32>
    %47 = tpu.matmul %45, %46, %cst_28 {dimension_numbers = #tpu.dot_dimension_numbers<[1], [0], [0], [1], [0, 0, 1, 1], [], []>} : vector<16x16xf32>, vector<16x32xf32>, vector<16x32xf32> -> vector<16x32xf32>
    %c0_29 = arith.constant 0 : index
    %c1_30 = arith.constant 1 : index
    %c0_31 = arith.constant 0 : index
    %c0_32 = arith.constant 0 : index
    %48 = vector.load %arg2[%c0_29, %c1_30, %c0_31, %c0_32] : memref<1x2x16x16xf32, #tpu.memory_space<vmem>>, vector<1x1x16x16xf32>
    %49 = vector.shape_cast %48 : vector<1x1x16x16xf32> to vector<16x16xf32>
    %50 = vector.extract_strided_slice %43 {offsets = [0, 32], sizes = [16, 32], strides = [1, 1]} : vector<16x64xf32> to vector<16x32xf32>
    %cst_33 = arith.constant dense<0.000000e+00> : vector<16x32xf32>
    %51 = tpu.matmul %49, %50, %cst_33 {dimension_numbers = #tpu.dot_dimension_numbers<[1], [0], [0], [1], [0, 0, 1, 1], [], []>} : vector<16x16xf32>, vector<16x32xf32>, vector<16x32xf32> -> vector<16x32xf32>
    %52 = tpu.concatenate %47, %51 in 1 : vector<16x32xf32>, vector<16x32xf32> -> vector<16x64xf32>
    %53 = vector.broadcast %2 : vector<1x64xf32> to vector<16x64xf32>
    %54 = arith.addf %52, %53 : vector<16x64xf32>
    %cst_34 = arith.constant 0.000000e+00 : f32
    %55 = vector.broadcast %cst_34 : f32 to vector<16x64xf32>
    %56 = arith.maximumf %54, %55 : vector<16x64xf32>
    %cst_35 = arith.constant dense<0.000000e+00> : vector<16x32xf32>
    %57 = tpu.matmul %56, %16, %cst_35 {dimension_numbers = #tpu.dot_dimension_numbers<[1], [0], [0], [1], [0, 0, 1, 1], [], []>} : vector<16x64xf32>, vector<64x32xf32>, vector<16x32xf32> -> vector<16x32xf32>
    %58 = vector.broadcast %5 : vector<1x32xf32> to vector<16x32xf32>
    %59 = arith.addf %57, %58 : vector<16x32xf32>
    %cst_36 = arith.constant 0.000000e+00 : f32
    %60 = vector.broadcast %cst_36 : f32 to vector<16x32xf32>
    %61 = arith.maximumf %59, %60 : vector<16x32xf32>
    %cst_37 = arith.constant dense<0.000000e+00> : vector<16x32xf32>
    %62 = tpu.matmul %61, %13, %cst_37 {dimension_numbers = #tpu.dot_dimension_numbers<[1], [0], [0], [1], [0, 0, 1, 1], [], []>} : vector<16x32xf32>, vector<32x32xf32>, vector<16x32xf32> -> vector<16x32xf32>
    %63 = vector.broadcast %6 : vector<1x32xf32> to vector<16x32xf32>
    %64 = arith.addf %62, %63 : vector<16x32xf32>
    %cst_38 = arith.constant dense<0.000000e+00> : vector<2x32xf32>
    %65 = tpu.matmul %20, %64, %cst_38 {dimension_numbers = #tpu.dot_dimension_numbers<[1], [0], [0], [1], [0, 0, 1, 1], [], []>} : vector<2x16xf32>, vector<16x32xf32>, vector<2x32xf32> -> vector<2x32xf32>
    %66 = vector.broadcast %7 : vector<1x32xf32> to vector<2x32xf32>
    %67 = arith.mulf %65, %66 : vector<2x32xf32>
    %cst_39 = arith.constant dense<0.000000e+00> : vector<2xf32>
    %68 = vector.multi_reduction <add>, %67, %cst_39 [1] : vector<2x32xf32> to vector<2xf32>
    %69 = vector.shape_cast %68 : vector<2xf32> to vector<2x1xf32>
    %70 = vector.broadcast %8 : vector<1x1xf32> to vector<2x1xf32>
    %71 = arith.addf %69, %70 : vector<2x1xf32>
    %c0_40 = arith.constant 0 : index
    %c0_41 = arith.constant 0 : index
    %c0_42 = arith.constant 0 : index
    %72 = vector.load %arg5[%c0_40, %c0_41, %c0_42] : memref<1x2x1xf32, #tpu.memory_space<vmem>>, vector<1x2x1xf32>
    %73 = vector.shape_cast %72 : vector<1x2x1xf32> to vector<2x1xf32>
    %74 = vector.shape_cast %71 : vector<2x1xf32> to vector<1x2x1xf32>
    tpu.vector_store %arg5[%c0_40, %c0_41, %c0_42], %74 {strides = array<i32>} : memref<1x2x1xf32, #tpu.memory_space<vmem>>, vector<1x2x1xf32>,
    return
  }
  func.func @transform_0(%arg0: i32) -> (i32, i32, i32) {
    %c0_i32 = arith.constant 0 : i32
    %c0_i32_0 = arith.constant 0 : i32
    %c0_i32_1 = arith.constant 0 : i32
    return %arg0, %c0_i32, %c0_i32_0 : i32, i32, i32
  }
  func.func @transform_1(%arg0: i32) -> (i32, i32, i32, i32) {
    %c0_i32 = arith.constant 0 : i32
    %c0_i32_0 = arith.constant 0 : i32
    %c0_i32_1 = arith.constant 0 : i32
    %c0_i32_2 = arith.constant 0 : i32
    return %arg0, %c0_i32, %c0_i32_0, %c0_i32_1 : i32, i32, i32, i32
  }
  func.func @transform_2(%arg0: i32) -> (i32, i32, i32) {
    %c0_i32 = arith.constant 0 : i32
    %c0_i32_0 = arith.constant 0 : i32
    %c0_i32_1 = arith.constant 0 : i32
    return %arg0, %c0_i32, %c0_i32_0 : i32, i32, i32
  }
  func.func @transform_3(%arg0: i32) -> (i32, i32) {
    %c0_i32 = arith.constant 0 : i32
    %c0_i32_0 = arith.constant 0 : i32
    %c0_i32_1 = arith.constant 0 : i32
    return %c0_i32, %c0_i32_0 : i32, i32
  }
  func.func @transform_4(%arg0: i32) -> (i32, i32, i32) {
    %c0_i32 = arith.constant 0 : i32
    %c0_i32_0 = arith.constant 0 : i32
    %c0_i32_1 = arith.constant 0 : i32
    return %arg0, %c0_i32, %c0_i32_0 : i32, i32, i32
  }
}

</mosaic_0001>

<llo_original>
// kernel: tpu_custom_call.1
$region0: #{tpu_custom_call.1}
  #allocation0 [shape = 'u32[]', space=smem, size = 0x4, offset = 0x4, fixed_abs, tag = 'smem constant byte address 0x4 - core index']
  #allocation1 [shape = 'u32[144,128]{1,0:T(1,128)}', space=vmem, size = 0x12000, scoped, tag = 'internal scratch']
  %s0 = inlined_call_operand.vmem [shape: f32[8,16,4], index: 0, kind: input, shape index: {}]
  %s1 = inlined_call_operand.hbm [shape: f32[8,2,16,16], index: 1, kind: input, shape index: {}]
  %s2 = inlined_call_operand.vmem [shape: f32[8,2,16], index: 2, kind: input, shape index: {}]
  %s3 = inlined_call_operand.vmem [shape: f32[112,128], index: 3, kind: input, shape index: {}]
  %s4 = inlined_call_operand.vmem [shape: f32[8,2,1], index: 4, kind: output, shape index: {}]
  %s5 = sld [smem:[#allocation0]]
  $region53: #{tpu_custom_call.1} parent=0
    _
  %s7 = ssub.s32 1, %s5
  %s8 = scalar_select 0, %s7, %s5
  $region1: #{tpu_custom_call.1} parent=0
    #allocation2 [shape = 'u8[32768]{0}', space=vmem, size = 0x8000, scoped, tag = 'input window, operand 1']
    #allocation3 [shape = 's32[2]{0}', space=sflag, size = 0x8, scoped, tag = 'scoped memory for tpu_custom_call.1']
    %9 = vsyncpa [#allocation3], 0
    %s10 = scalar_lea.sflag [#allocation3], 1
    %11 = vsyncpa %s10, 0
    loop: start=0, step=1, limit=10
    $region2: #{tpu_custom_call.1} parent=1 // loop_pre_header
      _
    $region3: #{tpu_custom_call.1} parent=1 // loop_header
      %s13 = sphi 0, %s17
      %p14 = scmp.ge.s32.totalorder %s13, 10
      %s23 = sphi 0, %s25
      %s26 = sphi 0, %s23
      %s27 = sphi 0, %s26
      %s43 = sphi 0, %s27
      %s49 = sphi 0, %s51
      %s52 = sphi 0, %s49
      %s53 = sphi 0, %s52
      %s69 = sphi 0, %s53
      %s75 = sphi 0, %s77
      %s78 = sphi 0, %s75
      %s79 = sphi 0, %s78
      %s95 = sphi 0, %s79
      %s99 = sphi 0, %s99
      %s101 = sphi 0, %s99
      %s102 = sphi 0, %s101
      %s116 = sphi 0, %s102
      %s122 = sphi 0, %s124
      %s125 = sphi 0, %s122
      %s126 = sphi 0, %s125
      %s142 = sphi 0, %s126
    $region4: #{tpu_custom_call.1} parent=1 // loop_header_branch
      %16 = sbr.rel (%p14) target = $region8
    $region5: #{tpu_custom_call.1} parent=1 // loop_body
      %s18 = ssub.s32 %s13, 1
      %s19 = ssub.s32 %s13, 2
      %s20 = sadd.s32 %s13, 1
      %s21 = ssub.s32 %s13, %s20
      %p22 = scmp.eq.s32.totalorder %s21, 0
      %s24 = sadd.s32 %s23, 1
      %s25 = scalar_select %p22, %s23, %s24
      %p28 = pneg %p22
      %p29 = scmp.eq.s32.totalorder %s13, 7
      %p30 = por %p28, %p29
      %p31 = scmp.ne.s32.totalorder %s23, %s26
      %p32 = scmp.eq.s32.totalorder %s13, 0
      %p33 = por %p31, %p32
      %p34 = scmp.ne.s32.totalorder %s23, %s26
      %p35 = scmp.eq.s32.totalorder %s18, 7
      %p36 = por %p34, %p35
      %p37 = scmp.ne.s32.totalorder %s26, %s27
      %p38 = scmp.eq.s32.totalorder %s18, 0
      %p39 = por %p37, %p38
      %p40 = scmp.ne.s32.totalorder %s26, %s27
      %p41 = scmp.eq.s32.totalorder %s19, 7
      %p42 = por %p40, %p41
      %p44 = scmp.ne.s32.totalorder %s27, %s43
      %p45 = scmp.eq.s32.totalorder %s19, 0
      %p46 = por %p44, %p45
      %s47 = ssub.s32 %s13, %s20
      %p48 = scmp.eq.s32.totalorder %s47, 0
      %s50 = sadd.s32 %s49, 1
      %s51 = scalar_select %p48, %s49, %s50
      %p54 = pneg %p48
      %p55 = scmp.eq.s32.totalorder %s13, 7
      %p56 = por %p54, %p55
      %p57 = scmp.ne.s32.totalorder %s49, %s52
      %p58 = scmp.eq.s32.totalorder %s13, 0
      %p59 = por %p57, %p58
      %p60 = scmp.ne.s32.totalorder %s49, %s52
      %p61 = scmp.eq.s32.totalorder %s18, 7
      %p62 = por %p60, %p61
      %p63 = scmp.ne.s32.totalorder %s52, %s53
      %p64 = scmp.eq.s32.totalorder %s18, 0
      %p65 = por %p63, %p64
      %p66 = scmp.ne.s32.totalorder %s52, %s53
      %p67 = scmp.eq.s32.totalorder %s19, 7
      %p68 = por %p66, %p67
      %p70 = scmp.ne.s32.totalorder %s53, %s69
      %p71 = scmp.eq.s32.totalorder %s19, 0
      %p72 = por %p70, %p71
      %s73 = ssub.s32 %s13, %s20
      %p74 = scmp.eq.s32.totalorder %s73, 0
      %s76 = sadd.s32 %s75, 1
      %s77 = scalar_select %p74, %s75, %s76
      %p80 = pneg %p74
      %p81 = scmp.eq.s32.totalorder %s13, 7
      %p82 = por %p80, %p81
      %p83 = scmp.ne.s32.totalorder %s75, %s78
      %p84 = scmp.eq.s32.totalorder %s13, 0
      %p85 = por %p83, %p84
      %p86 = scmp.ne.s32.totalorder %s75, %s78
      %p87 = scmp.eq.s32.totalorder %s18, 7
      %p88 = por %p86, %p87
      %p89 = scmp.ne.s32.totalorder %s78, %s79
      %p90 = scmp.eq.s32.totalorder %s18, 0
      %p91 = por %p89, %p90
      %p92 = scmp.ne.s32.totalorder %s78, %s79
      %p93 = scmp.eq.s32.totalorder %s19, 7
      %p94 = por %p92, %p93
      %p96 = scmp.ne.s32.totalorder %s79, %s95
      %p97 = scmp.eq.s32.totalorder %s19, 0
      %p98 = por %p96, %p97
      %s100 = sadd.s32 %s99, 1
      %p103 = scmp.eq.s32.totalorder %s13, 7
      %p104 = scmp.ne.s32.totalorder %s99, %s101
      %p105 = scmp.eq.s32.totalorder %s13, 0
      %p106 = por %p104, %p105
      %p107 = scmp.ne.s32.totalorder %s99, %s101
      %p108 = scmp.eq.s32.totalorder %s18, 7
      %p109 = por %p107, %p108
      %p110 = scmp.ne.s32.totalorder %s101, %s102
      %p111 = scmp.eq.s32.totalorder %s18, 0
      %p112 = por %p110, %p111
      %p113 = scmp.ne.s32.totalorder %s101, %s102
      %p114 = scmp.eq.s32.totalorder %s19, 7
      %p115 = por %p113, %p114
      %p117 = scmp.ne.s32.totalorder %s102, %s116
      %p118 = scmp.eq.s32.totalorder %s19, 0
      %p119 = por %p117, %p118
      %s120 = ssub.s32 %s13, %s20
      %p121 = scmp.eq.s32.totalorder %s120, 0
      %s123 = sadd.s32 %s122, 1
      %s124 = scalar_select %p121, %s122, %s123
      %p127 = pneg %p121
      %p128 = scmp.eq.s32.totalorder %s13, 7
      %p129 = por %p127, %p128
      %p130 = scmp.ne.s32.totalorder %s122, %s125
      %p131 = scmp.eq.s32.totalorder %s13, 0
      %p132 = por %p130, %p131
      %p133 = scmp.ne.s32.totalorder %s122, %s125
      %p134 = scmp.eq.s32.totalorder %s18, 7
      %p135 = por %p133, %p134
      %p136 = scmp.ne.s32.totalorder %s125, %s126
      %p137 = scmp.eq.s32.totalorder %s18, 0
      %p138 = por %p136, %p137
      %p139 = scmp.ne.s32.totalorder %s125, %s126
      %p140 = scmp.eq.s32.totalorder %s19, 7
      %p141 = por %p139, %p140
      %p143 = scmp.ne.s32.totalorder %s126, %s142
      %p144 = scmp.eq.s32.totalorder %s19, 0
      %p145 = por %p143, %p144
      %p146 = scmp.le.s32.totalorder 1, %s13
      %p147 = scmp.lt.s32.totalorder %s13, 9
      %p148 = pnand %p146, %p147
      %p149 = pneg %p148
      // Predicated region
      $region9: #{tpu_custom_call.1} parent=5 // pred_check
        _
      $region10: #{tpu_custom_call.1} parent=5 // pred_check_branch
        %151 = sbr.rel (%p148) target = $region12
      $region11: #{tpu_custom_call.1} parent=5 // pred_region
        %s152 = ssub.s32 %s13, 1
        // Predicated region
        $region13: #{tpu_custom_call.1} parent=11 // pred_check
          %p153 = pneg %p112
        $region14: #{tpu_custom_call.1} parent=11 // pred_check_branch
          %155 = sbr.rel (%p153) target = $region16
        $region15: #{tpu_custom_call.1} parent=11 // pred_region
          _
        $region16: #{tpu_custom_call.1} parent=11 // pred_fallthru
          _
      $region12: #{tpu_custom_call.1} parent=5 // pred_fallthru
        _
      %p156 = scmp.lt.s32.totalorder %s13, 8
      // Predicated region
      $region17: #{tpu_custom_call.1} parent=5 // pred_check
        %p157 = pneg %p156
      $region18: #{tpu_custom_call.1} parent=5 // pred_check_branch
        %159 = sbr.rel (%p157) target = $region20
      $region19: #{tpu_custom_call.1} parent=5 // pred_region
        // Predicated region
        $region21: #{tpu_custom_call.1} parent=19 // pred_check
          %p160 = pneg %p33
        $region22: #{tpu_custom_call.1} parent=19 // pred_check_branch
          %162 = sbr.rel (%p160) target = $region24
        $region23: #{tpu_custom_call.1} parent=19 // pred_region
          %p163 = scmp.lt.s32.totalorder %s13, 7
          %s164 = scalar_select %p163, %s13, 7
          %s165 = smul.addr %s164, 2
          %s166 = smul.addr %s165, 8
          %s167 = scalar_lea.vmem %s0, %s166
        $region24: #{tpu_custom_call.1} parent=19 // pred_fallthru
          _
        // Predicated region
        $region25: #{tpu_custom_call.1} parent=19 // pred_check
          %p168 = pneg %p59
        $region26: #{tpu_custom_call.1} parent=19 // pred_check_branch
          %170 = sbr.rel (%p168) target = $region28
        $region27: #{tpu_custom_call.1} parent=19 // pred_region
          %s171 = sand.u32 %s49, 1
          %s172 = scalar_lea.sflag [#allocation3], %s171
          %s173 = sand.u32 %s49, 1
          %s174 = smul.addr %s173, 32
          %s175 = scalar_lea.vmem [#allocation2], %s174
          %s177 = ssub.s32 512, 512
          %178 = vsyncadd %s172, %s177
          %s179 = smul.addr %s13, 4
          %s180 = smul.addr %s179, 128
          %s181 = scalar_lea.hbm %s1, %s180
          %s182 = sshll.u32 %s175, 4
          %s183 = int_to_ptr.vmem [resolvable:$true] %s182
          %188 = dma.hbm_to_vmem [thread:$0]  %s181, 512, %s183, %s172, 128, 128, 8
        $region28: #{tpu_custom_call.1} parent=19 // pred_fallthru
          _
        // Predicated region
        $region29: #{tpu_custom_call.1} parent=19 // pred_check
          %p189 = pneg %p85
        $region30: #{tpu_custom_call.1} parent=19 // pred_check_branch
          %191 = sbr.rel (%p189) target = $region32
        $region31: #{tpu_custom_call.1} parent=19 // pred_region
          %p192 = scmp.lt.s32.totalorder %s13, 7
          %s193 = scalar_select %p192, %s13, 7
          %s194 = smul.addr %s193, 2
          %s195 = scalar_lea.vmem %s2, %s194
        $region32: #{tpu_custom_call.1} parent=19 // pred_fallthru
          _
      $region20: #{tpu_custom_call.1} parent=5 // pred_fallthru
        _
      %p196 = scmp.le.s32.totalorder 1, %s13
      %p197 = scmp.lt.s32.totalorder %s13, 9
      %p198 = pnand %p196, %p197
      %p199 = pneg %p198
      // Predicated region
      $region33: #{tpu_custom_call.1} parent=5 // pred_check
        _
      $region34: #{tpu_custom_call.1} parent=5 // pred_check_branch
        %201 = sbr.rel (%p198) target = $region36
      $region35: #{tpu_custom_call.1} parent=5 // pred_region
        %s202 = ssub.s32 %s13, 1
        %s203 = sand.u32 %s52, 1
        %s204 = scalar_lea.sflag [#allocation3], %s203
        %s205 = sand.u32 %s52, 1
        %s206 = smul.addr %s205, 32
        %s207 = scalar_lea.vmem [#allocation2], %s206
        // Predicated region
        $region37: #{tpu_custom_call.1} parent=35 // pred_check
          %p208 = pneg %p65
        $region38: #{tpu_custom_call.1} parent=35 // pred_check_branch
          %210 = sbr.rel (%p208) target = $region40
        $region39: #{tpu_custom_call.1} parent=35 // pred_region
          %211 = dma.done %s204, 512
        $region40: #{tpu_custom_call.1} parent=35 // pred_fallthru
          _
        %p212 = scmp.lt.s32.totalorder %s18, 7
        %s213 = scalar_select %p212, %s18, 7
        %s214 = smul.addr %s213, 2
        %s215 = smul.addr %s214, 8
        %s216 = scalar_lea.vmem %s0, %s215
        %p217 = pneg %p39
        %p218 = pneg %p36
        %s219 = sand.u32 %s52, 1
        %s220 = scalar_lea.sflag [#allocation3], %s219
        %s221 = sand.u32 %s52, 1
        %s222 = smul.addr %s221, 32
        %s223 = scalar_lea.vmem [#allocation2], %s222
        %p224 = pneg %p65
        %p225 = pneg %p62
        %p226 = scmp.lt.s32.totalorder %s18, 7
        %s227 = scalar_select %p226, %s18, 7
        %s228 = smul.addr %s227, 2
        %s229 = scalar_lea.vmem %s2, %s228
        %p230 = pneg %p91
        %p231 = pneg %p88
        %p232 = pneg %p112
        %p233 = pneg %p109
        %p234 = pneg %p138
        %p235 = pneg %p135
        %p236 = scmp.lt.s32.totalorder %s18, 7
        %s237 = scalar_select %p236, %s18, 7
        %s238 = smul.addr %s237, 2
        %s239 = scalar_lea.vmem %s4, %s238
        %p240 = scmp.lt.s32.totalorder %s18, 7
        %s241 = scalar_select %p240, %s18, 7
        %s242 = smul.addr %s241, 2
        %s243 = smul.addr %s242, 8
        %s244 = scalar_lea.vmem %s0, %s243
        %p245 = scmp.lt.s32.totalorder %s18, 7
        %s246 = scalar_select %p245, %s18, 7
        %s247 = smul.addr %s246, 2
        %s248 = scalar_lea.vmem %s2, %s247
        %p249 = scmp.lt.s32.totalorder %s18, 7
        %s250 = scalar_select %p249, %s18, 7
        %s251 = smul.addr %s250, 2
        %s252 = scalar_lea.vmem %s4, %s251
        %v253 = vld [vmem:[%s3] sm:$0xff]
        %v254 = vld [vmem:[%s3 + $0x8] sm:$0xf]
        %v255 = vld [vmem:[%s3 + $0x10] sm:$0xff]
        %v256 = vld [vmem:[%s3 + $0x18] sm:$0xff]
        %v257 = vld [vmem:[%s3 + $0x20] sm:$0xff]
        %v258 = vld [vmem:[%s3 + $0x28] sm:$0xff]
        %v259 = vld [vmem:[%s3 + $0x30] sm:$0xff]
        %v260 = vld [vmem:[%s3 + $0x38] sm:$0xff]
        %v261 = vld [vmem:[%s3 + $0x40] sm:$0xff]
        %v262 = vld [vmem:[%s3 + $0x48] sm:$0xff]
        %v263 = vld [vmem:[%s3 + $0x50] sm:$0xff]
        %v264 = vld [vmem:[%s3 + $0x58] sm:$0xff]
        %v265 = vld [vmem:[%s3 + $0x60] sm:$0xff]
        %v266 = vld [vmem:[%s3 + $0x68] sm:$0xff]
        %v267 = vld [vmem:[%s244] sm:$0xff]
        %v268 = vld [vmem:[%s244 + $0x8] sm:$0xff]
        %v269 = vld [vmem:[%s248] sm:$0x3]
        %vm270 = vcmask 31744
        %v272 = vsel %vm270, %v267, 0
        %v275 = vsel %vm270, %v268, 0
        %vm277 = vcmask 1043456
        %v279 = vsel %vm277, %v254, 0
        %281 = vmatprep.subr.mxu0 0.0
        %282 = vmatpush1.msra.mxu0 %v279
        %283 = vmatprep.subr.mxu0 0.0
        %284 = vmatpush1.msra.mxu0 0.0
        %285 = vmatprep.subr.mxu0 0.0
        %286 = vmatpush1.msra.mxu0 0.0
        %287 = vmatprep.subr.mxu0 0.0
        %288 = vmatpush1.msra.mxu0 0.0
        %289 = vmatprep.subr.mxu0 0.0
        %290 = vmatpush1.msra.mxu0 0.0
        %291 = vmatprep.subr.mxu0 0.0
        %292 = vmatpush1.msra.mxu0 0.0
        %293 = vmatprep.subr.mxu0 0.0
        %294 = vmatpush1.msra.mxu0 0.0
        %295 = vmatprep.subr.mxu0 0.0
        %296 = vmatpush1.msra.mxu0 0.0
        %297 = vmatprep.subr.mxu0 0.0
        %298 = vmatpush1.msra.mxu0 0.0
        %299 = vmatprep.subr.mxu0 0.0
        %300 = vmatpush1.msra.mxu0 0.0
        %301 = vmatprep.subr.mxu0 0.0
        %302 = vmatpush1.msra.mxu0 0.0
        %303 = vmatprep.subr.mxu0 0.0
        %304 = vmatpush1.msra.mxu0 0.0
        %305 = vmatprep.subr.mxu0 0.0
        %306 = vmatpush1.msra.mxu0 0.0
        %307 = vmatprep.subr.mxu0 0.0
        %308 = vmatpush1.msra.mxu0 0.0
        %309 = vmatprep.subr.mxu0 0.0
        %310 = vmatpush1.msra.mxu0 0.0
        %311 = vmatprep.subr.mxu0 0.0
        %312 = vmatpush1.msra.mxu0 0.0
        %313 = vmatprep.subr.mxu0 0.0
        %314 = vmatpush1.msra.mxu0 0.0
        %315 = vmatprep.subr.mxu0 0.0
        %316 = vmatpush1.msra.mxu0 0.0
        %317 = vmatprep.subr.mxu0 0.0
        %318 = vmatpush1.msra.mxu0 0.0
        %319 = vmatprep.subr.mxu0 0.0
        %320 = vmatpush1.msra.mxu0 0.0
        %321 = vmatprep.subr.mxu0 0.0
        %322 = vmatpush1.msra.mxu0 0.0
        %323 = vmatprep.subr.mxu0 0.0
        %324 = vmatpush1.msra.mxu0 0.0
        %325 = vmatprep.subr.mxu0 0.0
        %326 = vmatpush1.msra.mxu0 0.0
        %327 = vmatprep.subr.mxu0 0.0
        %328 = vmatpush1.msra.mxu0 0.0
        %329 = vmatprep.subr.mxu0 0.0
        %330 = vmatpush1.msra.mxu0 0.0
        %331 = vmatprep.subr.mxu0 0.0
        %332 = vmatpush1.msra.mxu0 0.0
        %333 = vmatprep.subr.mxu0 0.0
        %334 = vmatpush1.msra.mxu0 0.0
        %335 = vmatprep.subr.mxu0 0.0
        %336 = vmatpush1.msra.mxu0 0.0
        %337 = vmatprep.subr.mxu0 0.0
        %338 = vmatpush1.msra.mxu0 0.0
        %339 = vmatprep.subr.mxu0 0.0
        %340 = vmatpush1.msra.mxu0 0.0
        %341 = vmatprep.subr.mxu0 0.0
        %342 = vmatpush1.msra.mxu0 0.0
        %343 = vmatprep.subr.mxu0 0.0
        %344 = vmatpush1.msra.mxu0 0.0
        %345 = vmatprep.mubr.f32.mxu0 0.0
        %346 = vmatmul.mubr.f32.gmra.mrb[0].mxu0 %v272
        %v347 = vpop.f32.mrb[0].mxu0
        %v348 = vadd.f32 0.0, %v347
        %v349 = vpop.f32.mrb[0].mxu0
        %350 = vmatprep.mubr.f32.mxu0 0.0
        %351 = vmatmul.mubr.f32.gmra.mrb[0].mxu0 %v275
        %v352 = vpop.f32.mrb[0].mxu0
        %v353 = vadd.f32 0.0, %v352
        %v354 = vpop.f32.mrb[0].mxu0
        %355 = vdwg.mxu0
        %v356 = vld [vmem:[%s207] sm:$0xff]
        %v357 = vld [vmem:[%s207 + $0x8] sm:$0xff]
        %vm358 = vcmask 130048
        %v360 = vsel %vm358, %v356, 0
        %v363 = vsel %vm358, %v357, 0
        %365 = vmatprep.subr.mxu0 0.0
        %366 = vmatpush1.msra.mxu0 %v348
        %367 = vmatprep.subr.mxu0 0.0
        %368 = vmatpush1.msra.mxu0 %v353
        %369 = vmatprep.subr.mxu0 0.0
        %370 = vmatpush1.msra.mxu0 0.0
        %371 = vmatprep.subr.mxu0 0.0
        %372 = vmatpush1.msra.mxu0 0.0
        %373 = vmatprep.subr.mxu0 0.0
        %374 = vmatpush1.msra.mxu0 0.0
        %375 = vmatprep.subr.mxu0 0.0
        %376 = vmatpush1.msra.mxu0 0.0
        %377 = vmatprep.subr.mxu0 0.0
        %378 = vmatpush1.msra.mxu0 0.0
        %379 = vmatprep.subr.mxu0 0.0
        %380 = vmatpush1.msra.mxu0 0.0
        %381 = vmatprep.subr.mxu0 0.0
        %382 = vmatpush1.msra.mxu0 0.0
        %383 = vmatprep.subr.mxu0 0.0
        %384 = vmatpush1.msra.mxu0 0.0
        %385 = vmatprep.subr.mxu0 0.0
        %386 = vmatpush1.msra.mxu0 0.0
        %387 = vmatprep.subr.mxu0 0.0
        %388 = vmatpush1.msra.mxu0 0.0
        %389 = vmatprep.subr.mxu0 0.0
        %390 = vmatpush1.msra.mxu0 0.0
        %391 = vmatprep.subr.mxu0 0.0
        %392 = vmatpush1.msra.mxu0 0.0
        %393 = vmatprep.subr.mxu0 0.0
        %394 = vmatpush1.msra.mxu0 0.0
        %395 = vmatprep.subr.mxu0 0.0
        %396 = vmatpush1.msra.mxu0 0.0
        %397 = vmatprep.subr.mxu0 0.0
        %398 = vmatpush1.msra.mxu0 0.0
        %399 = vmatprep.subr.mxu0 0.0
        %400 = vmatpush1.msra.mxu0 0.0
        %401 = vmatprep.subr.mxu0 0.0
        %402 = vmatpush1.msra.mxu0 0.0
        %403 = vmatprep.subr.mxu0 0.0
        %404 = vmatpush1.msra.mxu0 0.0
        %405 = vmatprep.subr.mxu0 0.0
        %406 = vmatpush1.msra.mxu0 0.0
        %407 = vmatprep.subr.mxu0 0.0
        %408 = vmatpush1.msra.mxu0 0.0
        %409 = vmatprep.subr.mxu0 0.0
        %410 = vmatpush1.msra.mxu0 0.0
        %411 = vmatprep.subr.mxu0 0.0
        %412 = vmatpush1.msra.mxu0 0.0
        %413 = vmatprep.subr.mxu0 0.0
        %414 = vmatpush1.msra.mxu0 0.0
        %415 = vmatprep.subr.mxu0 0.0
        %416 = vmatpush1.msra.mxu0 0.0
        %417 = vmatprep.subr.mxu0 0.0
        %418 = vmatpush1.msra.mxu0 0.0
        %419 = vmatprep.subr.mxu0 0.0
        %420 = vmatpush1.msra.mxu0 0.0
        %421 = vmatprep.subr.mxu0 0.0
        %422 = vmatpush1.msra.mxu0 0.0
        %423 = vmatprep.subr.mxu0 0.0
        %424 = vmatpush1.msra.mxu0 0.0
        %425 = vmatprep.subr.mxu0 0.0
        %426 = vmatpush1.msra.mxu0 0.0
        %427 = vmatprep.subr.mxu0 0.0
        %428 = vmatpush1.msra.mxu0 0.0
        %429 = vmatprep.mubr.f32.mxu0 0.0
        %430 = vmatmul.mubr.f32.gmra.mrb[0].mxu0 %v360
        %v431 = vpop.f32.mrb[0].mxu0
        %v432 = vadd.f32 0.0, %v431
        %v433 = vpop.f32.mrb[0].mxu0
        %434 = vmatprep.mubr.f32.mxu0 0.0
        %435 = vmatmul.mubr.f32.gmra.mrb[0].mxu0 %v363
        %v436 = vpop.f32.mrb[0].mxu0
        %v437 = vadd.f32 0.0, %v436
        %v438 = vpop.f32.mrb[0].mxu0
        %439 = vdwg.mxu0
        %s440 = scalar_lea.vmem %s207, 16 [#allocation2]
        %v441 = vld [vmem:[%s440] sm:$0xff]
        %v442 = vld [vmem:[%s440 + $0x8] sm:$0xff]
        %445 = vrot.lane.b32.xlu0 %v348, 96
        %v446 = vpop.permute.xlu0 %445
        %447 = vrot.lane.b32.xlu0 %v353, 96
        %v448 = vpop.permute.xlu0 %447
        %v452 = vsel %vm358, %v441, 0
        %v455 = vsel %vm358, %v442, 0
        %457 = vmatprep.subr.mxu0 0.0
        %458 = vmatpush1.msra.mxu0 %v446
        %459 = vmatprep.subr.mxu0 0.0
        %460 = vmatpush1.msra.mxu0 %v448
        %461 = vmatprep.subr.mxu0 0.0
        %462 = vmatpush1.msra.mxu0 0.0
        %463 = vmatprep.subr.mxu0 0.0
        %464 = vmatpush1.msra.mxu0 0.0
        %465 = vmatprep.subr.mxu0 0.0
        %466 = vmatpush1.msra.mxu0 0.0
        %467 = vmatprep.subr.mxu0 0.0
        %468 = vmatpush1.msra.mxu0 0.0
        %469 = vmatprep.subr.mxu0 0.0
        %470 = vmatpush1.msra.mxu0 0.0
        %471 = vmatprep.subr.mxu0 0.0
        %472 = vmatpush1.msra.mxu0 0.0
        %473 = vmatprep.subr.mxu0 0.0
        %474 = vmatpush1.msra.mxu0 0.0
        %475 = vmatprep.subr.mxu0 0.0
        %476 = vmatpush1.msra.mxu0 0.0
        %477 = vmatprep.subr.mxu0 0.0
        %478 = vmatpush1.msra.mxu0 0.0
        %479 = vmatprep.subr.mxu0 0.0
        %480 = vmatpush1.msra.mxu0 0.0
        %481 = vmatprep.subr.mxu0 0.0
        %482 = vmatpush1.msra.mxu0 0.0
        %483 = vmatprep.subr.mxu0 0.0
        %484 = vmatpush1.msra.mxu0 0.0
        %485 = vmatprep.subr.mxu0 0.0
        %486 = vmatpush1.msra.mxu0 0.0
        %487 = vmatprep.subr.mxu0 0.0
        %488 = vmatpush1.msra.mxu0 0.0
        %489 = vmatprep.subr.mxu0 0.0
        %490 = vmatpush1.msra.mxu0 0.0
        %491 = vmatprep.subr.mxu0 0.0
        %492 = vmatpush1.msra.mxu0 0.0
        %493 = vmatprep.subr.mxu0 0.0
        %494 = vmatpush1.msra.mxu0 0.0
        %495 = vmatprep.subr.mxu0 0.0
        %496 = vmatpush1.msra.mxu0 0.0
        %497 = vmatprep.subr.mxu0 0.0
        %498 = vmatpush1.msra.mxu0 0.0
        %499 = vmatprep.subr.mxu0 0.0
        %500 = vmatpush1.msra.mxu0 0.0
        %501 = vmatprep.subr.mxu0 0.0
        %502 = vmatpush1.msra.mxu0 0.0
        %503 = vmatprep.subr.mxu0 0.0
        %504 = vmatpush1.msra.mxu0 0.0
        %505 = vmatprep.subr.mxu0 0.0
        %506 = vmatpush1.msra.mxu0 0.0
        %507 = vmatprep.subr.mxu0 0.0
        %508 = vmatpush1.msra.mxu0 0.0
        %509 = vmatprep.subr.mxu0 0.0
        %510 = vmatpush1.msra.mxu0 0.0
        %511 = vmatprep.subr.mxu0 0.0
        %512 = vmatpush1.msra.mxu0 0.0
        %513 = vmatprep.subr.mxu0 0.0
        %514 = vmatpush1.msra.mxu0 0.0
        %515 = vmatprep.subr.mxu0 0.0
        %516 = vmatpush1.msra.mxu0 0.0
        %517 = vmatprep.subr.mxu0 0.0
        %518 = vmatpush1.msra.mxu0 0.0
        %519 = vmatprep.subr.mxu0 0.0
        %520 = vmatpush1.msra.mxu0 0.0
        %521 = vmatprep.mubr.f32.mxu0 0.0
        %522 = vmatmul.mubr.f32.gmra.mrb[0].mxu0 %v452
        %v523 = vpop.f32.mrb[0].mxu0
        %v524 = vadd.f32 0.0, %v523
        %v525 = vpop.f32.mrb[0].mxu0
        %526 = vmatprep.mubr.f32.mxu0 0.0
        %527 = vmatmul.mubr.f32.gmra.mrb[0].mxu0 %v455
        %v528 = vpop.f32.mrb[0].mxu0
        %v529 = vadd.f32 0.0, %v528
        %v530 = vpop.f32.mrb[0].mxu0
        %531 = vdwg.mxu0
        %534 = vrot.lane.b32.xlu0 %v524, 32
        %v535 = vpop.permute.xlu0 %534
        %536 = vrot.lane.b32.xlu0 %v529, 32
        %v537 = vpop.permute.xlu0 %536
        %vm540 = vcmask 261120
        %v541 = vsel %vm540, %v432, %v535
        %v542 = vsel %vm540, %v437, %v537
        %v543 = vlaneseq
        %v544 = vshrl.u32 %v543, 7
        %v545 = vsub.s32 0, %v544
        %v546 = vrot.slane %v253, %v545
        %v547 = vadd.f32 %v541, %v546
        %v548 = vadd.f32 %v542, %v546
        %v549 = vmax.f32 %v547, 0.0
        %v550 = vmax.f32 %v548, 0.0
        %v551 = vlaneseq
        %v552 = vshrl.u32 %v551, 7
        %v553 = vsub.s32 1, %v552
        %v554 = vrot.slane %v253, %v553
        %vm555 = vcmask 523264
        %v557 = vsel %vm555, %v549, 0
        %v560 = vsel %vm555, %v550, 0
        %562 = vmatprep.subr.mxu0 0.0
        %563 = vmatpush1.msra.mxu0 %v259
        %564 = vmatprep.subr.mxu0 0.0
        %565 = vmatpush1.msra.mxu0 %v260
        %566 = vmatprep.subr.mxu0 0.0
        %567 = vmatpush1.msra.mxu0 %v261
        %568 = vmatprep.subr.mxu0 0.0
        %569 = vmatpush1.msra.mxu0 %v262
        %570 = vmatprep.subr.mxu0 0.0
        %571 = vmatpush1.msra.mxu0 %v263
        %572 = vmatprep.subr.mxu0 0.0
        %573 = vmatpush1.msra.mxu0 %v264
        %574 = vmatprep.subr.mxu0 0.0
        %575 = vmatpush1.msra.mxu0 %v265
        %576 = vmatprep.subr.mxu0 0.0
        %577 = vmatpush1.msra.mxu0 %v266
        %578 = vmatprep.subr.mxu0 0.0
        %579 = vmatpush1.msra.mxu0 0.0
        %580 = vmatprep.subr.mxu0 0.0
        %581 = vmatpush1.msra.mxu0 0.0
        %582 = vmatprep.subr.mxu0 0.0
        %583 = vmatpush1.msra.mxu0 0.0
        %584 = vmatprep.subr.mxu0 0.0
        %585 = vmatpush1.msra.mxu0 0.0
        %586 = vmatprep.subr.mxu0 0.0
        %587 = vmatpush1.msra.mxu0 0.0
        %588 = vmatprep.subr.mxu0 0.0
        %589 = vmatpush1.msra.mxu0 0.0
        %590 = vmatprep.subr.mxu0 0.0
        %591 = vmatpush1.msra.mxu0 0.0
        %592 = vmatprep.subr.mxu0 0.0
        %593 = vmatpush1.msra.mxu0 0.0
        %594 = vmatprep.subr.mxu0 0.0
        %595 = vmatpush1.msra.mxu0 0.0
        %596 = vmatprep.subr.mxu0 0.0
        %597 = vmatpush1.msra.mxu0 0.0
        %598 = vmatprep.subr.mxu0 0.0
        %599 = vmatpush1.msra.mxu0 0.0
        %600 = vmatprep.subr.mxu0 0.0
        %601 = vmatpush1.msra.mxu0 0.0
        %602 = vmatprep.subr.mxu0 0.0
        %603 = vmatpush1.msra.mxu0 0.0
        %604 = vmatprep.subr.mxu0 0.0
        %605 = vmatpush1.msra.mxu0 0.0
        %606 = vmatprep.subr.mxu0 0.0
        %607 = vmatpush1.msra.mxu0 0.0
        %608 = vmatprep.subr.mxu0 0.0
        %609 = vmatpush1.msra.mxu0 0.0
        %610 = vmatprep.subr.mxu0 0.0
        %611 = vmatpush1.msra.mxu0 0.0
        %612 = vmatprep.subr.mxu0 0.0
        %613 = vmatpush1.msra.mxu0 0.0
        %614 = vmatprep.subr.mxu0 0.0
        %615 = vmatpush1.msra.mxu0 0.0
        %616 = vmatprep.subr.mxu0 0.0
        %617 = vmatpush1.msra.mxu0 0.0
        %618 = vmatprep.subr.mxu0 0.0
        %619 = vmatpush1.msra.mxu0 0.0
        %620 = vmatprep.subr.mxu0 0.0
        %621 = vmatpush1.msra.mxu0 0.0
        %622 = vmatprep.subr.mxu0 0.0
        %623 = vmatpush1.msra.mxu0 0.0
        %624 = vmatprep.subr.mxu0 0.0
        %625 = vmatpush1.msra.mxu0 0.0
        %626 = vmatprep.mubr.f32.mxu0 0.0
        %627 = vmatmul.mubr.f32.gmra.mrb[0].mxu0 %v557
        %v628 = vpop.f32.mrb[0].mxu0
        %v629 = vadd.f32 %v554, %v628
        %v630 = vpop.f32.mrb[0].mxu0
        %631 = vmatprep.mubr.f32.mxu0 0.0
        %632 = vmatmul.mubr.f32.gmra.mrb[0].mxu0 %v560
        %v633 = vpop.f32.mrb[0].mxu0
        %v634 = vadd.f32 %v554, %v633
        %v635 = vpop.f32.mrb[0].mxu0
        %636 = vdwg.mxu0
        %v637 = vmax.f32 %v629, 0.0
        %v638 = vmax.f32 %v634, 0.0
        %643 = vrot.lane.b32.xlu0 %v255, 64
        %v644 = vpop.permute.xlu0 %643
        %645 = vrot.lane.b32.xlu0 %v256, 64
        %v646 = vpop.permute.xlu0 %645
        %647 = vrot.lane.b32.xlu0 %v257, 64
        %v648 = vpop.permute.xlu0 %647
        %649 = vrot.lane.b32.xlu0 %v258, 64
        %v650 = vpop.permute.xlu0 %649
        %656 = vrot.lane.b32.xlu0 %v554, 96
        %v657 = vpop.permute.xlu0 %656
        %v660 = vsel %vm540, %v637, 0
        %v663 = vsel %vm540, %v638, 0
        %665 = vmatprep.subr.mxu0 0.0
        %666 = vmatpush1.msra.mxu0 %v644
        %667 = vmatprep.subr.mxu0 0.0
        %668 = vmatpush1.msra.mxu0 %v646
        %669 = vmatprep.subr.mxu0 0.0
        %670 = vmatpush1.msra.mxu0 %v648
        %671 = vmatprep.subr.mxu0 0.0
        %672 = vmatpush1.msra.mxu0 %v650
        %673 = vmatprep.subr.mxu0 0.0
        %674 = vmatpush1.msra.mxu0 0.0
        %675 = vmatprep.subr.mxu0 0.0
        %676 = vmatpush1.msra.mxu0 0.0
        %677 = vmatprep.subr.mxu0 0.0
        %678 = vmatpush1.msra.mxu0 0.0
        %679 = vmatprep.subr.mxu0 0.0
        %680 = vmatpush1.msra.mxu0 0.0
        %681 = vmatprep.subr.mxu0 0.0
        %682 = vmatpush1.msra.mxu0 0.0
        %683 = vmatprep.subr.mxu0 0.0
        %684 = vmatpush1.msra.mxu0 0.0
        %685 = vmatprep.subr.mxu0 0.0
        %686 = vmatpush1.msra.mxu0 0.0
        %687 = vmatprep.subr.mxu0 0.0
        %688 = vmatpush1.msra.mxu0 0.0
        %689 = vmatprep.subr.mxu0 0.0
        %690 = vmatpush1.msra.mxu0 0.0
        %691 = vmatprep.subr.mxu0 0.0
        %692 = vmatpush1.msra.mxu0 0.0
        %693 = vmatprep.subr.mxu0 0.0
        %694 = vmatpush1.msra.mxu0 0.0
        %695 = vmatprep.subr.mxu0 0.0
        %696 = vmatpush1.msra.mxu0 0.0
        %697 = vmatprep.subr.mxu0 0.0
        %698 = vmatpush1.msra.mxu0 0.0
        %699 = vmatprep.subr.mxu0 0.0
        %700 = vmatpush1.msra.mxu0 0.0
        %701 = vmatprep.subr.mxu0 0.0
        %702 = vmatpush1.msra.mxu0 0.0
        %703 = vmatprep.subr.mxu0 0.0
        %704 = vmatpush1.msra.mxu0 0.0
        %705 = vmatprep.subr.mxu0 0.0
        %706 = vmatpush1.msra.mxu0 0.0
        %707 = vmatprep.subr.mxu0 0.0
        %708 = vmatpush1.msra.mxu0 0.0
        %709 = vmatprep.subr.mxu0 0.0
        %710 = vmatpush1.msra.mxu0 0.0
        %711 = vmatprep.subr.mxu0 0.0
        %712 = vmatpush1.msra.mxu0 0.0
        %713 = vmatprep.subr.mxu0 0.0
        %714 = vmatpush1.msra.mxu0 0.0
        %715 = vmatprep.subr.mxu0 0.0
        %716 = vmatpush1.msra.mxu0 0.0
        %717 = vmatprep.subr.mxu0 0.0
        %718 = vmatpush1.msra.mxu0 0.0
        %719 = vmatprep.subr.mxu0 0.0
        %720 = vmatpush1.msra.mxu0 0.0
        %721 = vmatprep.subr.mxu0 0.0
        %722 = vmatpush1.msra.mxu0 0.0
        %723 = vmatprep.subr.mxu0 0.0
        %724 = vmatpush1.msra.mxu0 0.0
        %725 = vmatprep.subr.mxu0 0.0
        %726 = vmatpush1.msra.mxu0 0.0
        %727 = vmatprep.subr.mxu0 0.0
        %728 = vmatpush1.msra.mxu0 0.0
        %729 = vmatprep.mubr.f32.mxu0 0.0
        %730 = vmatmul.mubr.f32.gmra.mrb[0].mxu0 %v660
        %v731 = vpop.f32.mrb[0].mxu0
        %v732 = vadd.f32 %v657, %v731
        %v733 = vpop.f32.mrb[0].mxu0
        %734 = vmatprep.mubr.f32.mxu0 0.0
        %735 = vmatmul.mubr.f32.gmra.mrb[0].mxu0 %v663
        %v736 = vpop.f32.mrb[0].mxu0
        %v737 = vadd.f32 %v657, %v736
        %v738 = vpop.f32.mrb[0].mxu0
        %739 = vdwg.mxu0
        %v741 = vsel %vm540, %v732, 0
        %v744 = vsel %vm540, %v737, 0
        %746 = vmatprep.subr.mxu0 0.0
        %747 = vmatpush1.msra.mxu0 %v255
        %748 = vmatprep.subr.mxu0 0.0
        %749 = vmatpush1.msra.mxu0 %v256
        %750 = vmatprep.subr.mxu0 0.0
        %751 = vmatpush1.msra.mxu0 %v257
        %752 = vmatprep.subr.mxu0 0.0
        %753 = vmatpush1.msra.mxu0 %v258
        %754 = vmatprep.subr.mxu0 0.0
        %755 = vmatpush1.msra.mxu0 0.0
        %756 = vmatprep.subr.mxu0 0.0
        %757 = vmatpush1.msra.mxu0 0.0
        %758 = vmatprep.subr.mxu0 0.0
        %759 = vmatpush1.msra.mxu0 0.0
        %760 = vmatprep.subr.mxu0 0.0
        %761 = vmatpush1.msra.mxu0 0.0
        %762 = vmatprep.subr.mxu0 0.0
        %763 = vmatpush1.msra.mxu0 0.0
        %764 = vmatprep.subr.mxu0 0.0
        %765 = vmatpush1.msra.mxu0 0.0
        %766 = vmatprep.subr.mxu0 0.0
        %767 = vmatpush1.msra.mxu0 0.0
        %768 = vmatprep.subr.mxu0 0.0
        %769 = vmatpush1.msra.mxu0 0.0
        %770 = vmatprep.subr.mxu0 0.0
        %771 = vmatpush1.msra.mxu0 0.0
        %772 = vmatprep.subr.mxu0 0.0
        %773 = vmatpush1.msra.mxu0 0.0
        %774 = vmatprep.subr.mxu0 0.0
        %775 = vmatpush1.msra.mxu0 0.0
        %776 = vmatprep.subr.mxu0 0.0
        %777 = vmatpush1.msra.mxu0 0.0
        %778 = vmatprep.subr.mxu0 0.0
        %779 = vmatpush1.msra.mxu0 0.0
        %780 = vmatprep.subr.mxu0 0.0
        %781 = vmatpush1.msra.mxu0 0.0
        %782 = vmatprep.subr.mxu0 0.0
        %783 = vmatpush1.msra.mxu0 0.0
        %784 = vmatprep.subr.mxu0 0.0
        %785 = vmatpush1.msra.mxu0 0.0
        %786 = vmatprep.subr.mxu0 0.0
        %787 = vmatpush1.msra.mxu0 0.0
        %788 = vmatprep.subr.mxu0 0.0
        %789 = vmatpush1.msra.mxu0 0.0
        %790 = vmatprep.subr.mxu0 0.0
        %791 = vmatpush1.msra.mxu0 0.0
        %792 = vmatprep.subr.mxu0 0.0
        %793 = vmatpush1.msra.mxu0 0.0
        %794 = vmatprep.subr.mxu0 0.0
        %795 = vmatpush1.msra.mxu0 0.0
        %796 = vmatprep.subr.mxu0 0.0
        %797 = vmatpush1.msra.mxu0 0.0
        %798 = vmatprep.subr.mxu0 0.0
        %799 = vmatpush1.msra.mxu0 0.0
        %800 = vmatprep.subr.mxu0 0.0
        %801 = vmatpush1.msra.mxu0 0.0
        %802 = vmatprep.subr.mxu0 0.0
        %803 = vmatpush1.msra.mxu0 0.0
        %804 = vmatprep.subr.mxu0 0.0
        %805 = vmatpush1.msra.mxu0 0.0
        %806 = vmatprep.subr.mxu0 0.0
        %807 = vmatpush1.msra.mxu0 0.0
        %808 = vmatprep.subr.mxu0 0.0
        %809 = vmatpush1.msra.mxu0 0.0
        %810 = vmatprep.mubr.f32.mxu0 0.0
        %811 = vmatmul.mubr.f32.gmra.mrb[0].mxu0 %v741
        %v812 = vpop.f32.mrb[0].mxu0
        %v813 = vadd.f32 0.0, %v812
        %v814 = vpop.f32.mrb[0].mxu0
        %815 = vmatprep.mubr.f32.mxu0 0.0
        %816 = vmatmul.mubr.f32.gmra.mrb[0].mxu0 %v744
        %v817 = vpop.f32.mrb[0].mxu0
        %v818 = vadd.f32 0.0, %v817
        %v819 = vpop.f32.mrb[0].mxu0
        %820 = vdwg.mxu0
        %821 = vmatprep.subr.mxu0 0.0
        %822 = vmatpush1.msra.mxu0 %v813
        %823 = vmatprep.subr.mxu0 0.0
        %824 = vmatpush1.msra.mxu0 %v818
        %825 = vmatprep.subr.mxu0 0.0
        %826 = vmatpush1.msra.mxu0 0.0
        %827 = vmatprep.subr.mxu0 0.0
        %828 = vmatpush1.msra.mxu0 0.0
        %829 = vmatprep.subr.mxu0 0.0
        %830 = vmatpush1.msra.mxu0 0.0
        %831 = vmatprep.subr.mxu0 0.0
        %832 = vmatpush1.msra.mxu0 0.0
        %833 = vmatprep.subr.mxu0 0.0
        %834 = vmatpush1.msra.mxu0 0.0
        %835 = vmatprep.subr.mxu0 0.0
        %836 = vmatpush1.msra.mxu0 0.0
        %837 = vmatprep.subr.mxu0 0.0
        %838 = vmatpush1.msra.mxu0 0.0
        %839 = vmatprep.subr.mxu0 0.0
        %840 = vmatpush1.msra.mxu0 0.0
        %841 = vmatprep.subr.mxu0 0.0
        %842 = vmatpush1.msra.mxu0 0.0
        %843 = vmatprep.subr.mxu0 0.0
        %844 = vmatpush1.msra.mxu0 0.0
        %845 = vmatprep.subr.mxu0 0.0
        %846 = vmatpush1.msra.mxu0 0.0
        %847 = vmatprep.subr.mxu0 0.0
        %848 = vmatpush1.msra.mxu0 0.0
        %849 = vmatprep.subr.mxu0 0.0
        %850 = vmatpush1.msra.mxu0 0.0
        %851 = vmatprep.subr.mxu0 0.0
        %852 = vmatpush1.msra.mxu0 0.0
        %853 = vmatprep.subr.mxu0 0.0
        %854 = vmatpush1.msra.mxu0 0.0
        %855 = vmatprep.subr.mxu0 0.0
        %856 = vmatpush1.msra.mxu0 0.0
        %857 = vmatprep.subr.mxu0 0.0
        %858 = vmatpush1.msra.mxu0 0.0
        %859 = vmatprep.subr.mxu0 0.0
        %860 = vmatpush1.msra.mxu0 0.0
        %861 = vmatprep.subr.mxu0 0.0
        %862 = vmatpush1.msra.mxu0 0.0
        %863 = vmatprep.subr.mxu0 0.0
        %864 = vmatpush1.msra.mxu0 0.0
        %865 = vmatprep.subr.mxu0 0.0
        %866 = vmatpush1.msra.mxu0 0.0
        %867 = vmatprep.subr.mxu0 0.0
        %868 = vmatpush1.msra.mxu0 0.0
        %869 = vmatprep.subr.mxu0 0.0
        %870 = vmatpush1.msra.mxu0 0.0
        %871 = vmatprep.subr.mxu0 0.0
        %872 = vmatpush1.msra.mxu0 0.0
        %873 = vmatprep.subr.mxu0 0.0
        %874 = vmatpush1.msra.mxu0 0.0
        %875 = vmatprep.subr.mxu0 0.0
        %876 = vmatpush1.msra.mxu0 0.0
        %877 = vmatprep.subr.mxu0 0.0
        %878 = vmatpush1.msra.mxu0 0.0
        %879 = vmatprep.subr.mxu0 0.0
        %880 = vmatpush1.msra.mxu0 0.0
        %881 = vmatprep.subr.mxu0 0.0
        %882 = vmatpush1.msra.mxu0 0.0
        %883 = vmatprep.subr.mxu0 0.0
        %884 = vmatpush1.msra.mxu0 0.0
        %885 = vmatprep.mubr.f32.mxu0 0.0
        %886 = vmatmul.mubr.f32.gmra.mrb[0].mxu0 %v360
        %v887 = vpop.f32.mrb[0].mxu0
        %v888 = vadd.f32 0.0, %v887
        %v889 = vpop.f32.mrb[0].mxu0
        %890 = vmatprep.mubr.f32.mxu0 0.0
        %891 = vmatmul.mubr.f32.gmra.mrb[0].mxu0 %v363
        %v892 = vpop.f32.mrb[0].mxu0
        %v893 = vadd.f32 0.0, %v892
        %v894 = vpop.f32.mrb[0].mxu0
        %895 = vdwg.mxu0
        %898 = vrot.lane.b32.xlu0 %v813, 96
        %v899 = vpop.permute.xlu0 %898
        %900 = vrot.lane.b32.xlu0 %v818, 96
        %v901 = vpop.permute.xlu0 %900
        %904 = vmatprep.subr.mxu0 0.0
        %905 = vmatpush1.msra.mxu0 %v899
        %906 = vmatprep.subr.mxu0 0.0
        %907 = vmatpush1.msra.mxu0 %v901
        %908 = vmatprep.subr.mxu0 0.0
        %909 = vmatpush1.msra.mxu0 0.0
        %910 = vmatprep.subr.mxu0 0.0
        %911 = vmatpush1.msra.mxu0 0.0
        %912 = vmatprep.subr.mxu0 0.0
        %913 = vmatpush1.msra.mxu0 0.0
        %914 = vmatprep.subr.mxu0 0.0
        %915 = vmatpush1.msra.mxu0 0.0
        %916 = vmatprep.subr.mxu0 0.0
        %917 = vmatpush1.msra.mxu0 0.0
        %918 = vmatprep.subr.mxu0 0.0
        %919 = vmatpush1.msra.mxu0 0.0
        %920 = vmatprep.subr.mxu0 0.0
        %921 = vmatpush1.msra.mxu0 0.0
        %922 = vmatprep.subr.mxu0 0.0
        %923 = vmatpush1.msra.mxu0 0.0
        %924 = vmatprep.subr.mxu0 0.0
        %925 = vmatpush1.msra.mxu0 0.0
        %926 = vmatprep.subr.mxu0 0.0
        %927 = vmatpush1.msra.mxu0 0.0
        %928 = vmatprep.subr.mxu0 0.0
        %929 = vmatpush1.msra.mxu0 0.0
        %930 = vmatprep.subr.mxu0 0.0
        %931 = vmatpush1.msra.mxu0 0.0
        %932 = vmatprep.subr.mxu0 0.0
        %933 = vmatpush1.msra.mxu0 0.0
        %934 = vmatprep.subr.mxu0 0.0
        %935 = vmatpush1.msra.mxu0 0.0
        %936 = vmatprep.subr.mxu0 0.0
        %937 = vmatpush1.msra.mxu0 0.0
        %938 = vmatprep.subr.mxu0 0.0
        %939 = vmatpush1.msra.mxu0 0.0
        %940 = vmatprep.subr.mxu0 0.0
        %941 = vmatpush1.msra.mxu0 0.0
        %942 = vmatprep.subr.mxu0 0.0
        %943 = vmatpush1.msra.mxu0 0.0
        %944 = vmatprep.subr.mxu0 0.0
        %945 = vmatpush1.msra.mxu0 0.0
        %946 = vmatprep.subr.mxu0 0.0
        %947 = vmatpush1.msra.mxu0 0.0
        %948 = vmatprep.subr.mxu0 0.0
        %949 = vmatpush1.msra.mxu0 0.0
        %950 = vmatprep.subr.mxu0 0.0
        %951 = vmatpush1.msra.mxu0 0.0
        %952 = vmatprep.subr.mxu0 0.0
        %953 = vmatpush1.msra.mxu0 0.0
        %954 = vmatprep.subr.mxu0 0.0
        %955 = vmatpush1.msra.mxu0 0.0
        %956 = vmatprep.subr.mxu0 0.0
        %957 = vmatpush1.msra.mxu0 0.0
        %958 = vmatprep.subr.mxu0 0.0
        %959 = vmatpush1.msra.mxu0 0.0
        %960 = vmatprep.subr.mxu0 0.0
        %961 = vmatpush1.msra.mxu0 0.0
        %962 = vmatprep.subr.mxu0 0.0
        %963 = vmatpush1.msra.mxu0 0.0
        %964 = vmatprep.subr.mxu0 0.0
        %965 = vmatpush1.msra.mxu0 0.0
        %966 = vmatprep.subr.mxu0 0.0
        %967 = vmatpush1.msra.mxu0 0.0
        %968 = vmatprep.mubr.f32.mxu0 0.0
        %969 = vmatmul.mubr.f32.gmra.mrb[0].mxu0 %v452
        %v970 = vpop.f32.mrb[0].mxu0
        %v971 = vadd.f32 0.0, %v970
        %v972 = vpop.f32.mrb[0].mxu0
        %973 = vmatprep.mubr.f32.mxu0 0.0
        %974 = vmatmul.mubr.f32.gmra.mrb[0].mxu0 %v455
        %v975 = vpop.f32.mrb[0].mxu0
        %v976 = vadd.f32 0.0, %v975
        %v977 = vpop.f32.mrb[0].mxu0
        %978 = vdwg.mxu0
        %981 = vrot.lane.b32.xlu0 %v971, 32
        %v982 = vpop.permute.xlu0 %981
        %983 = vrot.lane.b32.xlu0 %v976, 32
        %v984 = vpop.permute.xlu0 %983
        %v987 = vsel %vm540, %v888, %v982
        %v988 = vsel %vm540, %v893, %v984
        %990 = vrot.lane.b32.xlu0 %v546, 64
        %v991 = vpop.permute.xlu0 %990
        %v993 = vadd.f32 %v987, %v991
        %v994 = vadd.f32 %v988, %v991
        %v995 = vmax.f32 %v993, 0.0
        %v996 = vmax.f32 %v994, 0.0
        %1005 = vrot.lane.b32.xlu0 %v259, 96
        %v1006 = vpop.permute.xlu0 %1005
        %1007 = vrot.lane.b32.xlu0 %v260, 96
        %v1008 = vpop.permute.xlu0 %1007
        %1009 = vrot.lane.b32.xlu0 %v261, 96
        %v1010 = vpop.permute.xlu0 %1009
        %1011 = vrot.lane.b32.xlu0 %v262, 96
        %v1012 = vpop.permute.xlu0 %1011
        %1013 = vrot.lane.b32.xlu0 %v263, 96
        %v1014 = vpop.permute.xlu0 %1013
        %1015 = vrot.lane.b32.xlu0 %v264, 96
        %v1016 = vpop.permute.xlu0 %1015
        %1017 = vrot.lane.b32.xlu0 %v265, 96
        %v1018 = vpop.permute.xlu0 %1017
        %1019 = vrot.lane.b32.xlu0 %v266, 96
        %v1020 = vpop.permute.xlu0 %1019
        %1029 = vrot.lane.b32.xlu0 %v554, 64
        %v1030 = vpop.permute.xlu0 %1029
        %v1033 = vsel %vm555, %v995, 0
        %v1036 = vsel %vm555, %v996, 0
        %1038 = vmatprep.subr.mxu0 0.0
        %1039 = vmatpush1.msra.mxu0 %v1006
        %1040 = vmatprep.subr.mxu0 0.0
        %1041 = vmatpush1.msra.mxu0 %v1008
        %1042 = vmatprep.subr.mxu0 0.0
        %1043 = vmatpush1.msra.mxu0 %v1010
        %1044 = vmatprep.subr.mxu0 0.0
        %1045 = vmatpush1.msra.mxu0 %v1012
        %1046 = vmatprep.subr.mxu0 0.0
        %1047 = vmatpush1.msra.mxu0 %v1014
        %1048 = vmatprep.subr.mxu0 0.0
        %1049 = vmatpush1.msra.mxu0 %v1016
        %1050 = vmatprep.subr.mxu0 0.0
        %1051 = vmatpush1.msra.mxu0 %v1018
        %1052 = vmatprep.subr.mxu0 0.0
        %1053 = vmatpush1.msra.mxu0 %v1020
        %1054 = vmatprep.subr.mxu0 0.0
        %1055 = vmatpush1.msra.mxu0 0.0
        %1056 = vmatprep.subr.mxu0 0.0
        %1057 = vmatpush1.msra.mxu0 0.0
        %1058 = vmatprep.subr.mxu0 0.0
        %1059 = vmatpush1.msra.mxu0 0.0
        %1060 = vmatprep.subr.mxu0 0.0
        %1061 = vmatpush1.msra.mxu0 0.0
        %1062 = vmatprep.subr.mxu0 0.0
        %1063 = vmatpush1.msra.mxu0 0.0
        %1064 = vmatprep.subr.mxu0 0.0
        %1065 = vmatpush1.msra.mxu0 0.0
        %1066 = vmatprep.subr.mxu0 0.0
        %1067 = vmatpush1.msra.mxu0 0.0
        %1068 = vmatprep.subr.mxu0 0.0
        %1069 = vmatpush1.msra.mxu0 0.0
        %1070 = vmatprep.subr.mxu0 0.0
        %1071 = vmatpush1.msra.mxu0 0.0
        %1072 = vmatprep.subr.mxu0 0.0
        %1073 = vmatpush1.msra.mxu0 0.0
        %1074 = vmatprep.subr.mxu0 0.0
        %1075 = vmatpush1.msra.mxu0 0.0
        %1076 = vmatprep.subr.mxu0 0.0
        %1077 = vmatpush1.msra.mxu0 0.0
        %1078 = vmatprep.subr.mxu0 0.0
        %1079 = vmatpush1.msra.mxu0 0.0
        %1080 = vmatprep.subr.mxu0 0.0
        %1081 = vmatpush1.msra.mxu0 0.0
        %1082 = vmatprep.subr.mxu0 0.0
        %1083 = vmatpush1.msra.mxu0 0.0
        %1084 = vmatprep.subr.mxu0 0.0
        %1085 = vmatpush1.msra.mxu0 0.0
        %1086 = vmatprep.subr.mxu0 0.0
        %1087 = vmatpush1.msra.mxu0 0.0
        %1088 = vmatprep.subr.mxu0 0.0
        %1089 = vmatpush1.msra.mxu0 0.0
        %1090 = vmatprep.subr.mxu0 0.0
        %1091 = vmatpush1.msra.mxu0 0.0
        %1092 = vmatprep.subr.mxu0 0.0
        %1093 = vmatpush1.msra.mxu0 0.0
        %1094 = vmatprep.subr.mxu0 0.0
        %1095 = vmatpush1.msra.mxu0 0.0
        %1096 = vmatprep.subr.mxu0 0.0
        %1097 = vmatpush1.msra.mxu0 0.0
        %1098 = vmatprep.subr.mxu0 0.0
        %1099 = vmatpush1.msra.mxu0 0.0
        %1100 = vmatprep.subr.mxu0 0.0
        %1101 = vmatpush1.msra.mxu0 0.0
        %1102 = vmatprep.mubr.f32.mxu0 0.0
        %1103 = vmatmul.mubr.f32.gmra.mrb[0].mxu0 %v1033
        %v1104 = vpop.f32.mrb[0].mxu0
        %v1105 = vadd.f32 %v1030, %v1104
        %v1106 = vpop.f32.mrb[0].mxu0
        %1107 = vmatprep.mubr.f32.mxu0 0.0
        %1108 = vmatmul.mubr.f32.gmra.mrb[0].mxu0 %v1036
        %v1109 = vpop.f32.mrb[0].mxu0
        %v1110 = vadd.f32 %v1030, %v1109
        %v1111 = vpop.f32.mrb[0].mxu0
        %1112 = vdwg.mxu0
        %v1113 = vmax.f32 %v1105, 0.0
        %v1114 = vmax.f32 %v1110, 0.0
        %1115 = vrot.lane.b32.xlu0 %v255, 32
        %v1116 = vpop.permute.xlu0 %1115
        %1117 = vrot.lane.b32.xlu0 %v256, 32
        %v1118 = vpop.permute.xlu0 %1117
        %1119 = vrot.lane.b32.xlu0 %v257, 32
        %v1120 = vpop.permute.xlu0 %1119
        %1121 = vrot.lane.b32.xlu0 %v258, 32
        %v1122 = vpop.permute.xlu0 %1121
        %1127 = vrot.lane.b32.xlu0 %v554, 32
        %v1128 = vpop.permute.xlu0 %1127
        %v1131 = vsel %vm540, %v1113, 0
        %v1134 = vsel %vm540, %v1114, 0
        %1136 = vmatprep.subr.mxu0 0.0
        %1137 = vmatpush1.msra.mxu0 %v1116
        %1138 = vmatprep.subr.mxu0 0.0
        %1139 = vmatpush1.msra.mxu0 %v1118
        %1140 = vmatprep.subr.mxu0 0.0
        %1141 = vmatpush1.msra.mxu0 %v1120
        %1142 = vmatprep.subr.mxu0 0.0
        %1143 = vmatpush1.msra.mxu0 %v1122
        %1144 = vmatprep.subr.mxu0 0.0
        %1145 = vmatpush1.msra.mxu0 0.0
        %1146 = vmatprep.subr.mxu0 0.0
        %1147 = vmatpush1.msra.mxu0 0.0
        %1148 = vmatprep.subr.mxu0 0.0
        %1149 = vmatpush1.msra.mxu0 0.0
        %1150 = vmatprep.subr.mxu0 0.0
        %1151 = vmatpush1.msra.mxu0 0.0
        %1152 = vmatprep.subr.mxu0 0.0
        %1153 = vmatpush1.msra.mxu0 0.0
        %1154 = vmatprep.subr.mxu0 0.0
        %1155 = vmatpush1.msra.mxu0 0.0
        %1156 = vmatprep.subr.mxu0 0.0
        %1157 = vmatpush1.msra.mxu0 0.0
        %1158 = vmatprep.subr.mxu0 0.0
        %1159 = vmatpush1.msra.mxu0 0.0
        %1160 = vmatprep.subr.mxu0 0.0
        %1161 = vmatpush1.msra.mxu0 0.0
        %1162 = vmatprep.subr.mxu0 0.0
        %1163 = vmatpush1.msra.mxu0 0.0
        %1164 = vmatprep.subr.mxu0 0.0
        %1165 = vmatpush1.msra.mxu0 0.0
        %1166 = vmatprep.subr.mxu0 0.0
        %1167 = vmatpush1.msra.mxu0 0.0
        %1168 = vmatprep.subr.mxu0 0.0
        %1169 = vmatpush1.msra.mxu0 0.0
        %1170 = vmatprep.subr.mxu0 0.0
        %1171 = vmatpush1.msra.mxu0 0.0
        %1172 = vmatprep.subr.mxu0 0.0
        %1173 = vmatpush1.msra.mxu0 0.0
        %1174 = vmatprep.subr.mxu0 0.0
        %1175 = vmatpush1.msra.mxu0 0.0
        %1176 = vmatprep.subr.mxu0 0.0
        %1177 = vmatpush1.msra.mxu0 0.0
        %1178 = vmatprep.subr.mxu0 0.0
        %1179 = vmatpush1.msra.mxu0 0.0
        %1180 = vmatprep.subr.mxu0 0.0
        %1181 = vmatpush1.msra.mxu0 0.0
        %1182 = vmatprep.subr.mxu0 0.0
        %1183 = vmatpush1.msra.mxu0 0.0
        %1184 = vmatprep.subr.mxu0 0.0
        %1185 = vmatpush1.msra.mxu0 0.0
        %1186 = vmatprep.subr.mxu0 0.0
        %1187 = vmatpush1.msra.mxu0 0.0
        %1188 = vmatprep.subr.mxu0 0.0
        %1189 = vmatpush1.msra.mxu0 0.0
        %1190 = vmatprep.subr.mxu0 0.0
        %1191 = vmatpush1.msra.mxu0 0.0
        %1192 = vmatprep.subr.mxu0 0.0
        %1193 = vmatpush1.msra.mxu0 0.0
        %1194 = vmatprep.subr.mxu0 0.0
        %1195 = vmatpush1.msra.mxu0 0.0
        %1196 = vmatprep.subr.mxu0 0.0
        %1197 = vmatpush1.msra.mxu0 0.0
        %1198 = vmatprep.subr.mxu0 0.0
        %1199 = vmatpush1.msra.mxu0 0.0
        %1200 = vmatprep.mubr.f32.mxu0 0.0
        %1201 = vmatmul.mubr.f32.gmra.mrb[0].mxu0 %v1131
        %v1202 = vpop.f32.mrb[0].mxu0
        %v1203 = vadd.f32 %v1128, %v1202
        %v1204 = vpop.f32.mrb[0].mxu0
        %1205 = vmatprep.mubr.f32.mxu0 0.0
        %1206 = vmatmul.mubr.f32.gmra.mrb[0].mxu0 %v1134
        %v1207 = vpop.f32.mrb[0].mxu0
        %v1208 = vadd.f32 %v1128, %v1207
        %v1209 = vpop.f32.mrb[0].mxu0
        %1210 = vdwg.mxu0
        %v1212 = vsel %vm358, %v269, 0
        %1214 = vmatprep.subr.mxu0 0.0
        %1215 = vmatpush1.msra.mxu0 %v1203
        %1216 = vmatprep.subr.mxu0 0.0
        %1217 = vmatpush1.msra.mxu0 %v1208
        %1218 = vmatprep.subr.mxu0 0.0
        %1219 = vmatpush1.msra.mxu0 0.0
        %1220 = vmatprep.subr.mxu0 0.0
        %1221 = vmatpush1.msra.mxu0 0.0
        %1222 = vmatprep.subr.mxu0 0.0
        %1223 = vmatpush1.msra.mxu0 0.0
        %1224 = vmatprep.subr.mxu0 0.0
        %1225 = vmatpush1.msra.mxu0 0.0
        %1226 = vmatprep.subr.mxu0 0.0
        %1227 = vmatpush1.msra.mxu0 0.0
        %1228 = vmatprep.subr.mxu0 0.0
        %1229 = vmatpush1.msra.mxu0 0.0
        %1230 = vmatprep.subr.mxu0 0.0
        %1231 = vmatpush1.msra.mxu0 0.0
        %1232 = vmatprep.subr.mxu0 0.0
        %1233 = vmatpush1.msra.mxu0 0.0
        %1234 = vmatprep.subr.mxu0 0.0
        %1235 = vmatpush1.msra.mxu0 0.0
        %1236 = vmatprep.subr.mxu0 0.0
        %1237 = vmatpush1.msra.mxu0 0.0
        %1238 = vmatprep.subr.mxu0 0.0
        %1239 = vmatpush1.msra.mxu0 0.0
        %1240 = vmatprep.subr.mxu0 0.0
        %1241 = vmatpush1.msra.mxu0 0.0
        %1242 = vmatprep.subr.mxu0 0.0
        %1243 = vmatpush1.msra.mxu0 0.0
        %1244 = vmatprep.subr.mxu0 0.0
        %1245 = vmatpush1.msra.mxu0 0.0
        %1246 = vmatprep.subr.mxu0 0.0
        %1247 = vmatpush1.msra.mxu0 0.0
        %1248 = vmatprep.subr.mxu0 0.0
        %1249 = vmatpush1.msra.mxu0 0.0
        %1250 = vmatprep.subr.mxu0 0.0
        %1251 = vmatpush1.msra.mxu0 0.0
        %1252 = vmatprep.subr.mxu0 0.0
        %1253 = vmatpush1.msra.mxu0 0.0
        %1254 = vmatprep.subr.mxu0 0.0
        %1255 = vmatpush1.msra.mxu0 0.0
        %1256 = vmatprep.subr.mxu0 0.0
        %1257 = vmatpush1.msra.mxu0 0.0
        %1258 = vmatprep.subr.mxu0 0.0
        %1259 = vmatpush1.msra.mxu0 0.0
        %1260 = vmatprep.subr.mxu0 0.0
        %1261 = vmatpush1.msra.mxu0 0.0
        %1262 = vmatprep.subr.mxu0 0.0
        %1263 = vmatpush1.msra.mxu0 0.0
        %1264 = vmatprep.subr.mxu0 0.0
        %1265 = vmatpush1.msra.mxu0 0.0
        %1266 = vmatprep.subr.mxu0 0.0
        %1267 = vmatpush1.msra.mxu0 0.0
        %1268 = vmatprep.subr.mxu0 0.0
        %1269 = vmatpush1.msra.mxu0 0.0
        %1270 = vmatprep.subr.mxu0 0.0
        %1271 = vmatpush1.msra.mxu0 0.0
        %1272 = vmatprep.subr.mxu0 0.0
        %1273 = vmatpush1.msra.mxu0 0.0
        %1274 = vmatprep.subr.mxu0 0.0
        %1275 = vmatpush1.msra.mxu0 0.0
        %1276 = vmatprep.subr.mxu0 0.0
        %1277 = vmatpush1.msra.mxu0 0.0
        %1278 = vmatprep.mubr.f32.mxu0 0.0
        %1279 = vmatmul.mubr.f32.gmra.mrb[0].mxu0 %v1212
        %v1280 = vpop.f32.mrb[0].mxu0
        %v1281 = vadd.f32 0.0, %v1280
        %v1282 = vpop.f32.mrb[0].mxu0
        %1283 = vdwg.mxu0
        %v1284 = vlaneseq
        %v1285 = vshrl.u32 %v1284, 7
        %v1286 = vsub.s32 2, %v1285
        %v1287 = vrot.slane %v253, %v1286
        %v1288 = vmul.f32 %v1281, %v1287
        %vm1289 = vcmask 254976
        %v1290 = vsel %vm1289, %v1288, 0.0
        %1291 = vadd.xlane.f32.xlu0 %v1290
        %v1292 = vpop.xlane.xlu0 %1291
        %v1293 = vadd.f32 %v1292, %v1287
        %1295 = vrot.lane.b32.xlu0 %v1293, 96
        %v1296 = vpop.permute.xlu0 %1295
        %vm1298 = vcmask 1024
        %1299 = vst.msk [vmem:[%s252] sm:$0x3] %vm1298, %v1296
        %p1300 = scmp.lt.s32.totalorder %s18, 7
        %s1301 = scalar_select %p1300, %s18, 7
        %s1302 = smul.addr %s1301, 2
        %s1303 = scalar_lea.vmem %s4, %s1302
        // Predicated region
        $region41: #{tpu_custom_call.1} parent=35 // pred_check
          %p1304 = pneg %p135
        $region42: #{tpu_custom_call.1} parent=35 // pred_check_branch
          %1306 = sbr.rel (%p1304) target = $region44
        $region43: #{tpu_custom_call.1} parent=35 // pred_region
          _
        $region44: #{tpu_custom_call.1} parent=35 // pred_fallthru
          _
      $region36: #{tpu_custom_call.1} parent=5 // pred_fallthru
        _
      %p1307 = scmp.le.s32.totalorder 2, %s13
      // Predicated region
      $region45: #{tpu_custom_call.1} parent=5 // pred_check
        %p1308 = pneg %p1307
      $region46: #{tpu_custom_call.1} parent=5 // pred_check_branch
        %1310 = sbr.rel (%p1308) target = $region48
      $region47: #{tpu_custom_call.1} parent=5 // pred_region
        %s1311 = ssub.s32 %s13, 2
        // Predicated region
        $region49: #{tpu_custom_call.1} parent=47 // pred_check
          %p1312 = pneg %p141
        $region50: #{tpu_custom_call.1} parent=47 // pred_check_branch
          %1314 = sbr.rel (%p1312) target = $region52
        $region51: #{tpu_custom_call.1} parent=47 // pred_region
          %p1315 = scmp.lt.s32.totalorder %s19, 7
          %s1316 = scalar_select %p1315, %s19, 7
          %s1317 = smul.addr %s1316, 2
          %s1318 = scalar_lea.vmem %s4, %s1317
        $region52: #{tpu_custom_call.1} parent=47 // pred_fallthru
          _
      $region48: #{tpu_custom_call.1} parent=5 // pred_fallthru
        _
    $region6: #{tpu_custom_call.1} parent=1 // loop_footer
      %s17 = sadd.s32 1, %s13
    $region7: #{tpu_custom_call.1} parent=1 // loop_footer_branch
      %12 = sbr.rel target = $region3
    $region8: #{tpu_custom_call.1} parent=1 // loop_exit
      _
    %1319 = vsyncpa [#allocation3], 1
    %s1320 = scalar_lea.sflag [#allocation3], 1
    %1321 = vsyncpa %s1320, 1

</llo_original>
